<compile_context>
chip_gen: v7x
topology: tpu7x:2x2x1
jax: 0.10.0
libtpu: 0.0.40
codegen_flags: <defaults>
</compile_context>

<pallas_src>
import functools

import jax
import jax.numpy as jnp
from jax import lax
from jax.experimental import pallas as pl
from jax.experimental.pallas import tpu as pltpu


# ---------------------------------------------------------------------------
# Fused kernel. Grid = (batch blocks ["parallel"], encoder layers ["arbitrary"]).
# The residual stream is carried across layer steps in VMEM scratch; the weighted
# segment reduction + logits run only on the last layer step.
# ---------------------------------------------------------------------------
def _attr_fused_kernel(x_ref, bias_ref, segw_ref, ui_ref, emb_ref,
                       wqkv_ref, bqkv_ref, wo_ref, bo_ref,
                       ln1g_ref, ln1b_ref, w1_ref, b1_ref, w2_ref, b2_ref,
                       ln2g_ref, ln2b_ref,
                       out_ref, x_scratch, *, num_heads, e_user):
    Bb, S, E = x_ref.shape
    H = num_heads
    d = E // H
    scale = 1.0 / (d ** 0.5)
    l = pl.program_id(1)
    n_layers = pl.num_programs(1)

    # Layer 0: seed the residual stream carried across the layer grid axis.
    # NOTE: S % 8 == 0 keeps the (Bb,S,E) <-> (Bb*S,E) reshapes pure views.
    @pl.when(l == 0)
    def _():
        x_scratch[...] = x_ref[...].reshape(Bb * S, E)

    x = x_scratch[...]                                    # (Bb*S, E) f32 residual stream
    x_bf = x.astype(jnp.bfloat16)                         # one bf16 copy per layer

    # ---- QKV projection: single (Bb*S, E) @ (E, 3E) matmul (full K=E) ----
    qkv = jnp.dot(x_bf, wqkv_ref[...],
                  preferred_element_type=jnp.float32) + bqkv_ref[...]     # (Bb*S, 3E)
    q = (qkv[:, :E] * scale).reshape(Bb, S, E)   # 1/sqrt(d) applied once per layer
    k = qkv[:, E:2 * E].reshape(Bb, S, E)
    v = qkv[:, 2 * E:].reshape(Bb, S, E)

    # ---- fold heads into the batch dim -> ONE batched score/context einsum per layer ----
    qh = jnp.concatenate([q[:, :, h * d:(h + 1) * d] for h in range(H)],
                         axis=0).astype(jnp.bfloat16)                     # (H*Bb, S, d)
    kh = jnp.concatenate([k[:, :, h * d:(h + 1) * d] for h in range(H)],
                         axis=0).astype(jnp.bfloat16)
    vh = jnp.concatenate([v[:, :, h * d:(h + 1) * d] for h in range(H)],
                         axis=0).astype(jnp.bfloat16)

    s = jnp.einsum('bqd,bkd->bqk', qh, kh,
                   preferred_element_type=jnp.float32)                    # (H*Bb, S, S)
    s = s + jnp.tile(bias_ref[...], (H, 1, 1))       # key-padding bias: once per layer
    s = s - jnp.max(s, axis=-1, keepdims=True)
    p = jnp.exp(s)
    p = p * pl.reciprocal(jnp.sum(p, axis=-1, keepdims=True), approx=True)
    ctx = jnp.einsum('bqk,bkd->bqd', p.astype(jnp.bfloat16), vh,
                     preferred_element_type=jnp.float32)                  # (H*Bb, S, d)

    # heads back into the feature dim (contiguous) -> SINGLE (Bb*S,E)@(E,E) out-projection
    ctx = jnp.concatenate([ctx[h * Bb:(h + 1) * Bb] for h in range(H)], axis=-1)  # (Bb,S,E)
    attn = jnp.dot(ctx.reshape(Bb * S, E).astype(jnp.bfloat16), wo_ref[...],
                   preferred_element_type=jnp.float32) + bo_ref[...]

    # ---- residual + LayerNorm1 (f32) ----
    h1 = x + attn
    mu = jnp.mean(h1, axis=-1, keepdims=True)
    var = jnp.mean((h1 - mu) ** 2, axis=-1, keepdims=True)
    h1 = (h1 - mu) * lax.rsqrt(var + 1e-5) * ln1g_ref[...] + ln1b_ref[...]

    # ---- feed-forward (relu) ----
    ff = jnp.dot(h1.astype(jnp.bfloat16), w1_ref[...],
                 preferred_element_type=jnp.float32) + b1_ref[...]
    ff = jnp.maximum(ff, 0.0)
    ff = jnp.dot(ff.astype(jnp.bfloat16), w2_ref[...],
                 preferred_element_type=jnp.float32) + b2_ref[...]

    # ---- residual + LayerNorm2 (f32) ----
    h2 = h1 + ff
    mu2 = jnp.mean(h2, axis=-1, keepdims=True)
    var2 = jnp.mean((h2 - mu2) ** 2, axis=-1, keepdims=True)
    x_new = (h2 - mu2) * lax.rsqrt(var2 + 1e-5) * ln2g_ref[...] + ln2b_ref[...]
    x_scratch[...] = x_new

    # ---- last layer: weighted segment reduce + logits, lane-dense output store ----
    @pl.when(l == n_layers - 1)
    def _():
        attr_attn = x_new.reshape(Bb, S, E)
        segw = segw_ref[...]                                  # (Bb, S, 2) [user | item] weights
        # M=2 contraction -> VPU weighted row-sums instead of a degenerate MXU matmul
        user_x = jnp.sum(segw[:, :, 0:1] * attr_attn, axis=1)           # (Bb, E)
        item_x = jnp.sum(segw[:, :, 1:2] * attr_attn, axis=1)           # (Bb, E)

        ui = ui_ref[...]                                       # (Bb, Eu+Ei)
        combo = jnp.concatenate(
            [user_x, ui[:, :e_user], item_x, ui[:, e_user:]], axis=-1)  # (Bb, 2D)

        # M=1 per example -> VPU multiply + lane reduction (emb is bf16, math in f32)
        logits = jnp.sum(combo[:, None, :] * emb_ref[...], axis=-1)     # (Bb, T_pad)
        out_ref[...] = logits


def attr_fused_forward(params, attr_embed, key_bias, seg_w, ui_embed, combo_emb,
                       *, num_heads, e_user, block_b=None):
    B, S, E = attr_embed.shape
    T_pad, D2 = combo_emb.shape[1], combo_emb.shape[2]
    Eui = ui_embed.shape[-1]
    L = params["wqkv"].shape[0]
    F = params["w1"].shape[-1]
    assert E % num_heads == 0

    if block_b is None:
        # Prefer >=2 grid steps on the parallel batch axis (pipelining + v7x megacore) while
        # keeping the folded matmul M = block_b*S >= 256 and block_b sublane-aligned.
        block_b = B
        for cand in range(B // 2, 0, -1):
            if B % cand == 0 and cand % 8 == 0 and cand * S >= 256:
                block_b = cand
                break
    assert B % block_b == 0
    assert block_b == B or block_b % 8 == 0   # sublane tiling of the 2-D blocks

    weights = (params["wqkv"], params["bqkv"], params["wo"], params["bo"],
               params["ln1_g"], params["ln1_b"], params["w1"], params["b1"],
               params["w2"], params["b2"], params["ln2_g"], params["ln2_b"])

    def layer_spec(a):
        # Stream one layer's slice per inner grid step (auto double-buffered by the pipeline).
        return pl.BlockSpec((None,) + a.shape[1:],
                            lambda b, l, _nd=a.ndim: (l,) + (0,) * (_nd - 1))

    in_specs = [
        pl.BlockSpec((block_b, S, E), lambda b, l: (b, 0, 0)),          # attr_embed (f32)
        pl.BlockSpec((block_b, 1, S), lambda b, l: (b, 0, 0)),          # key-padding bias
        pl.BlockSpec((block_b, S, 2), lambda b, l: (b, 0, 0)),          # segment weights
        pl.BlockSpec((block_b, Eui), lambda b, l: (b, 0)),              # user|item embeds
        pl.BlockSpec((block_b, T_pad, D2), lambda b, l: (b, 0, 0)),     # combo_emb (bf16)
    ] + [layer_spec(w) for w in weights]

    # Explicit scoped-VMEM budget (v5e default is only 16 MiB; v7x physical is 64 MiB/TC):
    # double-buffered per-layer weights + per-block activations + residual scratch, 2x headroom.
    w_bytes = 2 * (E * 3 * E + E * E + E * F + F * E) + 4 * (9 * E + F)
    act_bytes = 4 * block_b * (S * E + S + 2 * S + Eui + T_pad) + 2 * block_b * T_pad * D2
    scratch_bytes = 4 * block_b * S * E
    est = 2 * (w_bytes + act_bytes) + scratch_bytes
    vmem_limit = int(min(64 * 2 ** 20, max(32 * 2 ** 20, 2 * est)))

    return pl.pallas_call(
        functools.partial(_attr_fused_kernel, num_heads=num_heads, e_user=e_user),
        out_shape=jax.ShapeDtypeStruct((B, T_pad), jnp.float32),
        grid=(B // block_b, L),
        in_specs=in_specs,
        out_specs=pl.BlockSpec((block_b, T_pad), lambda b, l: (b, 0)),
        scratch_shapes=[pltpu.VMEM((block_b * S, E), jnp.float32)],
        compiler_params=pltpu.CompilerParams(
            dimension_semantics=("parallel", "arbitrary"),
            vmem_limit_bytes=vmem_limit),
    )(attr_embed, key_bias, seg_w, ui_embed, combo_emb, *weights)


# ---------------------------------------------------------------------------
# Full forward pass (glue in JAX, everything hot fused into one Pallas call)
# ---------------------------------------------------------------------------
def attr_network_forward(params, attr, attr_inds, attr_tf, attr_feat, attr_lens,
                         attr_lens_user, attr_lens_item, user_ids, item_ids,
                         pos_targets, pos_lens, neg_targets, neg_lens,
                         *, num_heads, num_layers, block_b=None):
    B, S = attr.shape
    del attr_inds  # unused by the reference forward
    assert num_layers == params["wqkv"].shape[0]

    attr_embed = params["attr_emb"][attr].astype(jnp.float32)            # (B, S, E)

    # f_generate_mask: True where position >= length (padded). Here as additive bias.
    pos_idx = jnp.arange(S)
    padded = pos_idx[None, :] >= attr_lens[:, None]
    key_bias = jnp.where(padded, -1e30, 0.0).astype(jnp.float32).reshape(B, 1, S)

    # m_feat_attrweight: sigmoid(Linear(13 -> 1)) -> per-example user/item mixing weight
    w_user = jax.nn.sigmoid(attr_feat @ params["w_feat"] + params["b_feat"])[:, 0]  # (B,)

    # per-example segment weights = gate * tf * segment-mask / segment-length, packed (B, S, 2)
    lu = attr_lens_user.astype(jnp.float32)
    li = attr_lens_item.astype(jnp.float32)
    m_user = (pos_idx[None, :] < attr_lens_user[:, None]).astype(jnp.float32)
    m_item = jnp.logical_and(
        pos_idx[None, :] >= attr_lens_user[:, None],
        pos_idx[None, :] < (attr_lens_user + attr_lens_item)[:, None]).astype(jnp.float32)
    tf = attr_tf.astype(jnp.float32)
    # NOTE: zero-length segments divide by zero (nan), matching the PyTorch reference.
    w_user_row = w_user[:, None] * tf * m_user / lu[:, None]
    w_item_row = (1.0 - w_user)[:, None] * tf * m_item / li[:, None]
    seg_w = jnp.stack([w_user_row, w_item_row], axis=-1)                 # (B, S, 2)

    user_embed = params["user_emb"][user_ids].astype(jnp.float32)        # (B, Eu)
    item_embed = params["item_emb"][item_ids].astype(jnp.float32)        # (B, Ei)
    e_user = user_embed.shape[-1]
    ui_embed = jnp.concatenate([user_embed, item_embed], axis=-1)        # (B, Eu+Ei)

    targets = jnp.concatenate([pos_targets, neg_targets], axis=1)        # (B, P+N)
    emb_user = params["out_emb_user"][targets]
    emb_item = params["out_emb_item"][targets]
    combo_emb = jnp.concatenate([emb_user, emb_item], axis=-1).astype(jnp.bfloat16)  # (B,T,2D)
    T = combo_emb.shape[1]
    T_pad = ((T + 127) // 128) * 128          # lane-dense output slab; sliced back below
    combo_emb = jnp.pad(combo_emb, ((0, 0), (0, T_pad - T), (0, 0)))

    logits_pad = attr_fused_forward(params, attr_embed, key_bias, seg_w, ui_embed, combo_emb,
                                    num_heads=num_heads, e_user=e_user, block_b=block_b)
    logits = logits_pad[:, :T]                                           # (B, P+N)

    P = pos_targets.shape[1]
    N = neg_targets.shape[1]
    pos_mask = jnp.arange(P)[None, :] < pos_lens[:, None]
    neg_mask = jnp.arange(N)[None, :] < neg_lens[:, None]
    mask = jnp.concatenate([pos_mask, neg_mask], axis=-1)                # bool (B, P+N)

    new_targets = jnp.concatenate([jnp.ones_like(pos_targets),
                                   jnp.zeros_like(neg_targets)], axis=1)
    new_targets = new_targets * mask
    return logits, mask, new_targets


# ---------------------------------------------------------------------------
# Deterministic parameter init (shapes implied by the module's __init__)
# Transformer-layer weights are stacked over layers; matmul weights stored bf16.
# ---------------------------------------------------------------------------
def init_params(key, vocab, n_user, n_item, E, Eu, Ei, F, num_layers, feat_num=13):
    D_out = E + Eu  # see TODO(synk) above
    ks = jax.random.split(key, 14)
    u = lambda k, s, r=0.1: jax.random.uniform(k, s, jnp.float32, -r, r)
    params = {
        "attr_emb": u(ks[0], (vocab, E)),
        "user_emb": u(ks[1], (n_user, Eu)),
        "item_emb": u(ks[2], (n_item, Ei)),
        "out_emb_user": u(ks[3], (vocab, D_out)),
        "out_emb_item": u(ks[4], (vocab, D_out)),
        "w_feat": u(ks[5], (feat_num, 1)),
        "b_feat": u(ks[6], (1,)),
        "wqkv": u(ks[7], (num_layers, E, 3 * E)).astype(jnp.bfloat16),
        "bqkv": u(ks[8], (num_layers, 1, 3 * E), 0.05),
        "wo": u(ks[9], (num_layers, E, E)).astype(jnp.bfloat16),
        "bo": u(ks[10], (num_layers, 1, E), 0.05),
        "ln1_g": jnp.ones((num_layers, 1, E), jnp.float32),
        "ln1_b": jnp.zeros((num_layers, 1, E), jnp.float32),
        "w1": u(ks[11], (num_layers, E, F)).astype(jnp.bfloat16),
        "b1": jnp.zeros((num_layers, 1, F), jnp.float32),
        "w2": u(ks[12], (num_layers, F, E)).astype(jnp.bfloat16),
        "b2": jnp.zeros((num_layers, 1, E), jnp.float32),
        "ln2_g": jnp.ones((num_layers, 1, E), jnp.float32),
        "ln2_b": jnp.zeros((num_layers, 1, E), jnp.float32),
    }
    return params


if __name__ == "__main__":
    key = jax.random.PRNGKey(0)
    B, S = 2, 8
    E, Eu, Ei = 32, 16, 16
    H, L, F = 2, 2, 64
    vocab, n_user, n_item = 50, 10, 12
    P = N = 6
    feat_num = 13

    kp, k1, k2, k3, k4, k5, k6, k7 = jax.random.split(key, 8)
    params = init_params(kp, vocab, n_user, n_item, E, Eu, Ei, F, L, feat_num)

    attr = jax.random.randint(k1, (B, S), 0, vocab, jnp.int32)
    attr_inds = jnp.zeros((B, S), jnp.int32)
    attr_tf = jax.random.uniform(k2, (B, S), jnp.float32)
    attr_feat = jax.random.normal(k3, (B, feat_num), jnp.float32)
    attr_lens_user = jnp.array([5, 3], jnp.int32)
    attr_lens_item = jnp.array([3, 3], jnp.int32)
    attr_lens = attr_lens_user + attr_lens_item            # max == S
    user_ids = jax.random.randint(k4, (B,), 0, n_user, jnp.int32)
    item_ids = jax.random.randint(k5, (B,), 0, n_item, jnp.int32)
    pos_targets = jax.random.randint(k6, (B, P), 0, vocab, jnp.int32)
    pos_lens = jnp.array([6, 4], jnp.int32)                # max == P
    neg_targets = jax.random.randint(k7, (B, N), 0, vocab, jnp.int32)
    neg_lens = jnp.array([6, 5], jnp.int32)                # max == N

    fwd = jax.jit(functools.partial(attr_network_forward, num_heads=H, num_layers=L))
    logits, mask, new_targets = fwd(
        params, attr, attr_inds, attr_tf, attr_feat, attr_lens,
        attr_lens_user, attr_lens_item, user_ids, item_ids,
        pos_targets, pos_lens, neg_targets, neg_lens)

    jax.block_until_ready(logits)
    jax.block_until_ready(mask)
    jax.block_until_ready(new_targets)
    assert logits.shape == (B, P + N) and mask.shape == (B, P + N)
    assert new_targets.shape == (B, P + N)
    print("KERNEL_OK")
</pallas_src>

<mosaic_0001>
module attributes {stable_mosaic.version = 11 : i64} {
  func.func @_attr_fused_kernel(%arg0: i32, %arg1: i32, %arg2: memref<2x8x32xf32, #tpu.memory_space<vmem>>, %arg3: memref<2x1x8xf32, #tpu.memory_space<vmem>>, %arg4: memref<2x8x2xf32, #tpu.memory_space<vmem>>, %arg5: memref<2x32xf32, #tpu.memory_space<vmem>>, %arg6: memref<2x128x96xbf16, #tpu.memory_space<vmem>>, %arg7: memref<1x32x96xbf16, #tpu.memory_space<vmem>>, %arg8: memref<1x1x96xf32, #tpu.memory_space<vmem>>, %arg9: memref<1x32x32xbf16, #tpu.memory_space<vmem>>, %arg10: memref<1x1x32xf32, #tpu.memory_space<vmem>>, %arg11: memref<1x1x32xf32, #tpu.memory_space<vmem>>, %arg12: memref<1x1x32xf32, #tpu.memory_space<vmem>>, %arg13: memref<1x32x64xbf16, #tpu.memory_space<vmem>>, %arg14: memref<1x1x64xf32, #tpu.memory_space<vmem>>, %arg15: memref<1x64x32xbf16, #tpu.memory_space<vmem>>, %arg16: memref<1x1x32xf32, #tpu.memory_space<vmem>>, %arg17: memref<1x1x32xf32, #tpu.memory_space<vmem>>, %arg18: memref<1x1x32xf32, #tpu.memory_space<vmem>>, %arg19: memref<2x128xf32, #tpu.memory_space<vmem>>, %arg20: memref<16x32xf32, #tpu.memory_space<vmem>>) attributes {dimension_semantics = [#tpu.dimension_semantics<parallel>, #tpu.dimension_semantics<arbitrary>], iteration_bounds = array<i64: 1, 2>, scalar_prefetch = 0 : i64, scratch_operands = 1 : i64, tpu.core_type = #tpu.core_type<tc>, window_params = [{transform_indices = @transform_0, window_bounds = array<i64: 2, 8, 32>}, {transform_indices = @transform_1, window_bounds = array<i64: 2, 1, 8>}, {transform_indices = @transform_2, window_bounds = array<i64: 2, 8, 2>}, {transform_indices = @transform_3, window_bounds = array<i64: 2, 32>}, {transform_indices = @transform_4, window_bounds = array<i64: 2, 128, 96>}, {transform_indices = @transform_5, window_bounds = array<i64: 1, 32, 96>}, {transform_indices = @transform_6, window_bounds = array<i64: 1, 1, 96>}, {transform_indices = @transform_7, window_bounds = array<i64: 1, 32, 32>}, {transform_indices = @transform_8, window_bounds = array<i64: 1, 1, 32>}, {transform_indices = @transform_9, window_bounds = array<i64: 1, 1, 32>}, {transform_indices = @transform_10, window_bounds = array<i64: 1, 1, 32>}, {transform_indices = @transform_11, window_bounds = array<i64: 1, 32, 64>}, {transform_indices = @transform_12, window_bounds = array<i64: 1, 1, 64>}, {transform_indices = @transform_13, window_bounds = array<i64: 1, 64, 32>}, {transform_indices = @transform_14, window_bounds = array<i64: 1, 1, 32>}, {transform_indices = @transform_15, window_bounds = array<i64: 1, 1, 32>}, {transform_indices = @transform_16, window_bounds = array<i64: 1, 1, 32>}, {transform_indices = @transform_17, window_bounds = array<i64: 2, 128>}]} {
    %c0_i32 = arith.constant 0 : i32
    %0 = arith.cmpi eq, %arg1, %c0_i32 : i32
    %1 = arith.extui %0 : i1 to i32
    %c0_i32_0 = arith.constant 0 : i32
    %2 = arith.cmpi ne, %1, %c0_i32_0 : i32
    scf.if %2 {
      %c0_63 = arith.constant 0 : index
      %c0_64 = arith.constant 0 : index
      %c0_65 = arith.constant 0 : index
      %137 = vector.load %arg2[%c0_63, %c0_64, %c0_65] : memref<2x8x32xf32, #tpu.memory_space<vmem>>, vector<2x8x32xf32>
      %138 = vector.shape_cast %137 : vector<2x8x32xf32> to vector<16x32xf32>
      %c0_66 = arith.constant 0 : index
      %c0_67 = arith.constant 0 : index
      %139 = vector.load %arg20[%c0_66, %c0_67] : memref<16x32xf32, #tpu.memory_space<vmem>>, vector<16x32xf32>
      tpu.vector_store %arg20[%c0_66, %c0_67], %138 {strides = array<i32>} : memref<16x32xf32, #tpu.memory_space<vmem>>, vector<16x32xf32>,
    } else {
    }
    %c0 = arith.constant 0 : index
    %c0_1 = arith.constant 0 : index
    %3 = vector.load %arg20[%c0, %c0_1] : memref<16x32xf32, #tpu.memory_space<vmem>>, vector<16x32xf32>
    %4 = arith.truncf %3 : vector<16x32xf32> to vector<16x32xbf16>
    %c0_2 = arith.constant 0 : index
    %c0_3 = arith.constant 0 : index
    %c0_4 = arith.constant 0 : index
    %5 = vector.load %arg7[%c0_2, %c0_3, %c0_4] : memref<1x32x96xbf16, #tpu.memory_space<vmem>>, vector<1x32x96xbf16>
    %6 = vector.shape_cast %5 : vector<1x32x96xbf16> to vector<32x96xbf16>
    %cst = arith.constant dense<0.000000e+00> : vector<16x96xf32>
    %7 = tpu.matmul %4, %6, %cst {dimension_numbers = #tpu.dot_dimension_numbers<[1], [0], [0], [1], [0, 0, 1, 1], [], []>} : vector<16x32xbf16>, vector<32x96xbf16>, vector<16x96xf32> -> vector<16x96xf32>
    %c0_5 = arith.constant 0 : index
    %c0_6 = arith.constant 0 : index
    %c0_7 = arith.constant 0 : index
    %8 = vector.load %arg8[%c0_5, %c0_6, %c0_7] : memref<1x1x96xf32, #tpu.memory_space<vmem>>, vector<1x1x96xf32>
    %9 = vector.shape_cast %8 : vector<1x1x96xf32> to vector<1x96xf32>
    %10 = vector.broadcast %9 : vector<1x96xf32> to vector<16x96xf32>
    %11 = arith.addf %7, %10 : vector<16x96xf32>
    %12 = vector.extract_strided_slice %11 {offsets = [0, 0], sizes = [16, 32], strides = [1, 1]} : vector<16x96xf32> to vector<16x32xf32>
    %cst_8 = arith.constant 2.500000e-01 : f32
    %13 = vector.broadcast %cst_8 : f32 to vector<16x32xf32>
    %14 = arith.mulf %12, %13 : vector<16x32xf32>
    %15 = vector.shape_cast %14 : vector<16x32xf32> to vector<2x8x32xf32>
    %16 = vector.extract_strided_slice %11 {offsets = [0, 32], sizes = [16, 32], strides = [1, 1]} : vector<16x96xf32> to vector<16x32xf32>
    %17 = vector.shape_cast %16 : vector<16x32xf32> to vector<2x8x32xf32>
    %18 = vector.extract_strided_slice %11 {offsets = [0, 64], sizes = [16, 32], strides = [1, 1]} : vector<16x96xf32> to vector<16x32xf32>
    %19 = vector.shape_cast %18 : vector<16x32xf32> to vector<2x8x32xf32>
    %20 = vector.extract_strided_slice %15 {offsets = [0, 0, 0], sizes = [2, 8, 16], strides = [1, 1, 1]} : vector<2x8x32xf32> to vector<2x8x16xf32>
    %21 = vector.extract_strided_slice %15 {offsets = [0, 0, 16], sizes = [2, 8, 16], strides = [1, 1, 1]} : vector<2x8x32xf32> to vector<2x8x16xf32>
    %22 = tpu.concatenate %20, %21 in 0 : vector<2x8x16xf32>, vector<2x8x16xf32> -> vector<4x8x16xf32>
    %23 = arith.truncf %22 : vector<4x8x16xf32> to vector<4x8x16xbf16>
    %24 = vector.extract_strided_slice %17 {offsets = [0, 0, 0], sizes = [2, 8, 16], strides = [1, 1, 1]} : vector<2x8x32xf32> to vector<2x8x16xf32>
    %25 = vector.extract_strided_slice %17 {offsets = [0, 0, 16], sizes = [2, 8, 16], strides = [1, 1, 1]} : vector<2x8x32xf32> to vector<2x8x16xf32>
    %26 = tpu.concatenate %24, %25 in 0 : vector<2x8x16xf32>, vector<2x8x16xf32> -> vector<4x8x16xf32>
    %27 = arith.truncf %26 : vector<4x8x16xf32> to vector<4x8x16xbf16>
    %28 = vector.extract_strided_slice %19 {offsets = [0, 0, 0], sizes = [2, 8, 16], strides = [1, 1, 1]} : vector<2x8x32xf32> to vector<2x8x16xf32>
    %29 = vector.extract_strided_slice %19 {offsets = [0, 0, 16], sizes = [2, 8, 16], strides = [1, 1, 1]} : vector<2x8x32xf32> to vector<2x8x16xf32>
    %30 = tpu.concatenate %28, %29 in 0 : vector<2x8x16xf32>, vector<2x8x16xf32> -> vector<4x8x16xf32>
    %31 = arith.truncf %30 : vector<4x8x16xf32> to vector<4x8x16xbf16>
    "tpu.trace_start"() <{level = 10 : i32, message = "bqd,bkd->bqk"}> : () -> ()
    %cst_9 = arith.constant dense<0.000000e+00> : vector<4x8x8xf32>
    %32 = tpu.matmul %23, %27, %cst_9 {dimension_numbers = #tpu.dot_dimension_numbers<[2], [2], [1], [1], [0, 0, 0, 1, 1, 1], [0], [0]>} : vector<4x8x16xbf16>, vector<4x8x16xbf16>, vector<4x8x8xf32> -> vector<4x8x8xf32>
    "tpu.trace_stop"() : () -> ()
    %c0_10 = arith.constant 0 : index
    %c0_11 = arith.constant 0 : index
    %c0_12 = arith.constant 0 : index
    %33 = vector.load %arg3[%c0_10, %c0_11, %c0_12] : memref<2x1x8xf32, #tpu.memory_space<vmem>>, vector<2x1x8xf32>
    %34 = tpu.concatenate %33, %33 in 0 : vector<2x1x8xf32>, vector<2x1x8xf32> -> vector<4x1x8xf32>
    %35 = vector.broadcast %34 : vector<4x1x8xf32> to vector<4x8x8xf32>
    %36 = arith.addf %32, %35 : vector<4x8x8xf32>
    %cst_13 = arith.constant dense<0xFF800000> : vector<4x8xf32>
    %37 = vector.multi_reduction <maximumf>, %36, %cst_13 [2] : vector<4x8x8xf32> to vector<4x8xf32>
    %38 = vector.shape_cast %37 : vector<4x8xf32> to vector<4x8x1xf32>
    %39 = vector.broadcast %38 : vector<4x8x1xf32> to vector<4x8x8xf32>
    %40 = arith.subf %36, %39 : vector<4x8x8xf32>
    %41 = math.exp %40 : vector<4x8x8xf32>
    %cst_14 = arith.constant dense<0.000000e+00> : vector<4x8xf32>
    %42 = vector.multi_reduction <add>, %41, %cst_14 [2] : vector<4x8x8xf32> to vector<4x8xf32>
    %43 = vector.shape_cast %42 : vector<4x8xf32> to vector<4x8x1xf32>
    %44 = tpu.reciprocal %43 {approx = true} : vector<4x8x1xf32> -> vector<4x8x1xf32>
    %45 = vector.broadcast %44 : vector<4x8x1xf32> to vector<4x8x8xf32>
    %46 = arith.mulf %41, %45 : vector<4x8x8xf32>
    %47 = arith.truncf %46 : vector<4x8x8xf32> to vector<4x8x8xbf16>
    "tpu.trace_start"() <{level = 10 : i32, message = "bqk,bkd->bqd"}> : () -> ()
    %cst_15 = arith.constant dense<0.000000e+00> : vector<4x8x16xf32>
    %48 = tpu.matmul %47, %31, %cst_15 {dimension_numbers = #tpu.dot_dimension_numbers<[2], [1], [1], [2], [0, 0, 0, 1, 1, 2], [0], [0]>} : vector<4x8x8xbf16>, vector<4x8x16xbf16>, vector<4x8x16xf32> -> vector<4x8x16xf32>
    "tpu.trace_stop"() : () -> ()
    %49 = vector.extract_strided_slice %48 {offsets = [0, 0, 0], sizes = [2, 8, 16], strides = [1, 1, 1]} : vector<4x8x16xf32> to vector<2x8x16xf32>
    %50 = vector.extract_strided_slice %48 {offsets = [2, 0, 0], sizes = [2, 8, 16], strides = [1, 1, 1]} : vector<4x8x16xf32> to vector<2x8x16xf32>
    %51 = tpu.concatenate %49, %50 in 2 : vector<2x8x16xf32>, vector<2x8x16xf32> -> vector<2x8x32xf32>
    %52 = vector.shape_cast %51 : vector<2x8x32xf32> to vector<16x32xf32>
    %53 = arith.truncf %52 : vector<16x32xf32> to vector<16x32xbf16>
    %c0_16 = arith.constant 0 : index
    %c0_17 = arith.constant 0 : index
    %c0_18 = arith.constant 0 : index
    %54 = vector.load %arg9[%c0_16, %c0_17, %c0_18] : memref<1x32x32xbf16, #tpu.memory_space<vmem>>, vector<1x32x32xbf16>
    %55 = vector.shape_cast %54 : vector<1x32x32xbf16> to vector<32x32xbf16>
    %cst_19 = arith.constant dense<0.000000e+00> : vector<16x32xf32>
    %56 = tpu.matmul %53, %55, %cst_19 {dimension_numbers = #tpu.dot_dimension_numbers<[1], [0], [0], [1], [0, 0, 1, 1], [], []>} : vector<16x32xbf16>, vector<32x32xbf16>, vector<16x32xf32> -> vector<16x32xf32>
    %c0_20 = arith.constant 0 : index
    %c0_21 = arith.constant 0 : index
    %c0_22 = arith.constant 0 : index
    %57 = vector.load %arg10[%c0_20, %c0_21, %c0_22] : memref<1x1x32xf32, #tpu.memory_space<vmem>>, vector<1x1x32xf32>
    %58 = vector.shape_cast %57 : vector<1x1x32xf32> to vector<1x32xf32>
    %59 = vector.broadcast %58 : vector<1x32xf32> to vector<16x32xf32>
    %60 = arith.addf %56, %59 : vector<16x32xf32>
    %61 = arith.addf %3, %60 : vector<16x32xf32>
    %cst_23 = arith.constant dense<0.000000e+00> : vector<16xf32>
    %62 = vector.multi_reduction <add>, %61, %cst_23 [1] : vector<16x32xf32> to vector<16xf32>
    %63 = vector.shape_cast %62 : vector<16xf32> to vector<16x1xf32>
    %cst_24 = arith.constant 3.200000e+01 : f32
    %64 = vector.broadcast %cst_24 : f32 to vector<16x1xf32>
    %65 = arith.divf %63, %64 : vector<16x1xf32>
    %66 = vector.broadcast %65 : vector<16x1xf32> to vector<16x32xf32>
    %67 = arith.subf %61, %66 : vector<16x32xf32>
    %68 = arith.mulf %67, %67 : vector<16x32xf32>
    %cst_25 = arith.constant dense<0.000000e+00> : vector<16xf32>
    %69 = vector.multi_reduction <add>, %68, %cst_25 [1] : vector<16x32xf32> to vector<16xf32>
    %70 = vector.shape_cast %69 : vector<16xf32> to vector<16x1xf32>
    %cst_26 = arith.constant 3.200000e+01 : f32
    %71 = vector.broadcast %cst_26 : f32 to vector<16x1xf32>
    %72 = arith.divf %70, %71 : vector<16x1xf32>
    %73 = vector.broadcast %65 : vector<16x1xf32> to vector<16x32xf32>
    %74 = arith.subf %61, %73 : vector<16x32xf32>
    %cst_27 = arith.constant 9.99999974E-6 : f32
    %75 = vector.broadcast %cst_27 : f32 to vector<16x1xf32>
    %76 = arith.addf %72, %75 : vector<16x1xf32>
    %77 = math.rsqrt %76 : vector<16x1xf32>
    %78 = vector.broadcast %77 : vector<16x1xf32> to vector<16x32xf32>
    %79 = arith.mulf %74, %78 : vector<16x32xf32>
    %c0_28 = arith.constant 0 : index
    %c0_29 = arith.constant 0 : index
    %c0_30 = arith.constant 0 : index
    %80 = vector.load %arg11[%c0_28, %c0_29, %c0_30] : memref<1x1x32xf32, #tpu.memory_space<vmem>>, vector<1x1x32xf32>
    %81 = vector.shape_cast %80 : vector<1x1x32xf32> to vector<1x32xf32>
    %82 = vector.broadcast %81 : vector<1x32xf32> to vector<16x32xf32>
    %83 = arith.mulf %79, %82 : vector<16x32xf32>
    %c0_31 = arith.constant 0 : index
    %c0_32 = arith.constant 0 : index
    %c0_33 = arith.constant 0 : index
    %84 = vector.load %arg12[%c0_31, %c0_32, %c0_33] : memref<1x1x32xf32, #tpu.memory_space<vmem>>, vector<1x1x32xf32>
    %85 = vector.shape_cast %84 : vector<1x1x32xf32> to vector<1x32xf32>
    %86 = vector.broadcast %85 : vector<1x32xf32> to vector<16x32xf32>
    %87 = arith.addf %83, %86 : vector<16x32xf32>
    %88 = arith.truncf %87 : vector<16x32xf32> to vector<16x32xbf16>
    %c0_34 = arith.constant 0 : index
    %c0_35 = arith.constant 0 : index
    %c0_36 = arith.constant 0 : index
    %89 = vector.load %arg13[%c0_34, %c0_35, %c0_36] : memref<1x32x64xbf16, #tpu.memory_space<vmem>>, vector<1x32x64xbf16>
    %90 = vector.shape_cast %89 : vector<1x32x64xbf16> to vector<32x64xbf16>
    %cst_37 = arith.constant dense<0.000000e+00> : vector<16x64xf32>
    %91 = tpu.matmul %88, %90, %cst_37 {dimension_numbers = #tpu.dot_dimension_numbers<[1], [0], [0], [1], [0, 0, 1, 1], [], []>} : vector<16x32xbf16>, vector<32x64xbf16>, vector<16x64xf32> -> vector<16x64xf32>
    %c0_38 = arith.constant 0 : index
    %c0_39 = arith.constant 0 : index
    %c0_40 = arith.constant 0 : index
    %92 = vector.load %arg14[%c0_38, %c0_39, %c0_40] : memref<1x1x64xf32, #tpu.memory_space<vmem>>, vector<1x1x64xf32>
    %93 = vector.shape_cast %92 : vector<1x1x64xf32> to vector<1x64xf32>
    %94 = vector.broadcast %93 : vector<1x64xf32> to vector<16x64xf32>
    %95 = arith.addf %91, %94 : vector<16x64xf32>
    %cst_41 = arith.constant 0.000000e+00 : f32
    %96 = vector.broadcast %cst_41 : f32 to vector<16x64xf32>
    %97 = arith.maximumf %95, %96 : vector<16x64xf32>
    %98 = arith.truncf %97 : vector<16x64xf32> to vector<16x64xbf16>
    %c0_42 = arith.constant 0 : index
    %c0_43 = arith.constant 0 : index
    %c0_44 = arith.constant 0 : index
    %99 = vector.load %arg15[%c0_42, %c0_43, %c0_44] : memref<1x64x32xbf16, #tpu.memory_space<vmem>>, vector<1x64x32xbf16>
    %100 = vector.shape_cast %99 : vector<1x64x32xbf16> to vector<64x32xbf16>
    %cst_45 = arith.constant dense<0.000000e+00> : vector<16x32xf32>
    %101 = tpu.matmul %98, %100, %cst_45 {dimension_numbers = #tpu.dot_dimension_numbers<[1], [0], [0], [1], [0, 0, 1, 1], [], []>} : vector<16x64xbf16>, vector<64x32xbf16>, vector<16x32xf32> -> vector<16x32xf32>
    %c0_46 = arith.constant 0 : index
    %c0_47 = arith.constant 0 : index
    %c0_48 = arith.constant 0 : index
    %102 = vector.load %arg16[%c0_46, %c0_47, %c0_48] : memref<1x1x32xf32, #tpu.memory_space<vmem>>, vector<1x1x32xf32>
    %103 = vector.shape_cast %102 : vector<1x1x32xf32> to vector<1x32xf32>
    %104 = vector.broadcast %103 : vector<1x32xf32> to vector<16x32xf32>
    %105 = arith.addf %101, %104 : vector<16x32xf32>
    %106 = arith.addf %87, %105 : vector<16x32xf32>
    %cst_49 = arith.constant dense<0.000000e+00> : vector<16xf32>
    %107 = vector.multi_reduction <add>, %106, %cst_49 [1] : vector<16x32xf32> to vector<16xf32>
    %108 = vector.shape_cast %107 : vector<16xf32> to vector<16x1xf32>
    %cst_50 = arith.constant 3.200000e+01 : f32
    %109 = vector.broadcast %cst_50 : f32 to vector<16x1xf32>
    %110 = arith.divf %108, %109 : vector<16x1xf32>
    %111 = vector.broadcast %110 : vector<16x1xf32> to vector<16x32xf32>
    %112 = arith.subf %106, %111 : vector<16x32xf32>
    %113 = arith.mulf %112, %112 : vector<16x32xf32>
    %cst_51 = arith.constant dense<0.000000e+00> : vector<16xf32>
    %114 = vector.multi_reduction <add>, %113, %cst_51 [1] : vector<16x32xf32> to vector<16xf32>
    %115 = vector.shape_cast %114 : vector<16xf32> to vector<16x1xf32>
    %cst_52 = arith.constant 3.200000e+01 : f32
    %116 = vector.broadcast %cst_52 : f32 to vector<16x1xf32>
    %117 = arith.divf %115, %116 : vector<16x1xf32>
    %118 = vector.broadcast %110 : vector<16x1xf32> to vector<16x32xf32>
    %119 = arith.subf %106, %118 : vector<16x32xf32>
    %cst_53 = arith.constant 9.99999974E-6 : f32
    %120 = vector.broadcast %cst_53 : f32 to vector<16x1xf32>
    %121 = arith.addf %117, %120 : vector<16x1xf32>
    %122 = math.rsqrt %121 : vector<16x1xf32>
    %123 = vector.broadcast %122 : vector<16x1xf32> to vector<16x32xf32>
    %124 = arith.mulf %119, %123 : vector<16x32xf32>
    %c0_54 = arith.constant 0 : index
    %c0_55 = arith.constant 0 : index
    %c0_56 = arith.constant 0 : index
    %125 = vector.load %arg17[%c0_54, %c0_55, %c0_56] : memref<1x1x32xf32, #tpu.memory_space<vmem>>, vector<1x1x32xf32>
    %126 = vector.shape_cast %125 : vector<1x1x32xf32> to vector<1x32xf32>
    %127 = vector.broadcast %126 : vector<1x32xf32> to vector<16x32xf32>
    %128 = arith.mulf %124, %127 : vector<16x32xf32>
    %c0_57 = arith.constant 0 : index
    %c0_58 = arith.constant 0 : index
    %c0_59 = arith.constant 0 : index
    %129 = vector.load %arg18[%c0_57, %c0_58, %c0_59] : memref<1x1x32xf32, #tpu.memory_space<vmem>>, vector<1x1x32xf32>
    %130 = vector.shape_cast %129 : vector<1x1x32xf32> to vector<1x32xf32>
    %131 = vector.broadcast %130 : vector<1x32xf32> to vector<16x32xf32>
    %132 = arith.addf %128, %131 : vector<16x32xf32>
    %c0_60 = arith.constant 0 : index
    %c0_61 = arith.constant 0 : index
    %133 = vector.load %arg20[%c0_60, %c0_61] : memref<16x32xf32, #tpu.memory_space<vmem>>, vector<16x32xf32>
    tpu.vector_store %arg20[%c0_60, %c0_61], %132 {strides = array<i32>} : memref<16x32xf32, #tpu.memory_space<vmem>>, vector<16x32xf32>,
    %c1_i32 = arith.constant 1 : i32
    %134 = arith.cmpi eq, %arg1, %c1_i32 : i32
    %135 = arith.extui %134 : i1 to i32
    %c0_i32_62 = arith.constant 0 : i32
    %136 = arith.cmpi ne, %135, %c0_i32_62 : i32
    scf.if %136 {
      %137 = vector.shape_cast %132 : vector<16x32xf32> to vector<2x8x32xf32>
      %c0_63 = arith.constant 0 : index
      %c0_64 = arith.constant 0 : index
      %c0_65 = arith.constant 0 : index
      %138 = vector.load %arg4[%c0_63, %c0_64, %c0_65] : memref<2x8x2xf32, #tpu.memory_space<vmem>>, vector<2x8x2xf32>
      %139 = vector.extract_strided_slice %138 {offsets = [0, 0, 0], sizes = [2, 8, 1], strides = [1, 1, 1]} : vector<2x8x2xf32> to vector<2x8x1xf32>
      %140 = vector.broadcast %139 : vector<2x8x1xf32> to vector<2x8x32xf32>
      %141 = arith.mulf %140, %137 : vector<2x8x32xf32>
      %cst_66 = arith.constant dense<0.000000e+00> : vector<2x32xf32>
      %142 = vector.multi_reduction <add>, %141, %cst_66 [1] : vector<2x8x32xf32> to vector<2x32xf32>
      %143 = vector.extract_strided_slice %138 {offsets = [0, 0, 1], sizes = [2, 8, 1], strides = [1, 1, 1]} : vector<2x8x2xf32> to vector<2x8x1xf32>
      %144 = vector.broadcast %143 : vector<2x8x1xf32> to vector<2x8x32xf32>
      %145 = arith.mulf %144, %137 : vector<2x8x32xf32>
      %cst_67 = arith.constant dense<0.000000e+00> : vector<2x32xf32>
      %146 = vector.multi_reduction <add>, %145, %cst_67 [1] : vector<2x8x32xf32> to vector<2x32xf32>
      %c0_68 = arith.constant 0 : index
      %c0_69 = arith.constant 0 : index
      %147 = vector.load %arg5[%c0_68, %c0_69] : memref<2x32xf32, #tpu.memory_space<vmem>>, vector<2x32xf32>
      %148 = vector.extract_strided_slice %147 {offsets = [0, 0], sizes = [2, 16], strides = [1, 1]} : vector<2x32xf32> to vector<2x16xf32>
      %149 = vector.extract_strided_slice %147 {offsets = [0, 16], sizes = [2, 16], strides = [1, 1]} : vector<2x32xf32> to vector<2x16xf32>
      %150 = tpu.concatenate %142, %148, %146, %149 in 1 : vector<2x32xf32>, vector<2x16xf32>, vector<2x32xf32>, vector<2x16xf32> -> vector<2x96xf32>
      %151 = vector.shape_cast %150 : vector<2x96xf32> to vector<2x1x96xf32>
      %c0_70 = arith.constant 0 : index
      %c0_71 = arith.constant 0 : index
      %c0_72 = arith.constant 0 : index
      %152 = vector.load %arg6[%c0_70, %c0_71, %c0_72] : memref<2x128x96xbf16, #tpu.memory_space<vmem>>, vector<2x128x96xbf16>
      %153 = arith.extf %152 : vector<2x128x96xbf16> to vector<2x128x96xf32>
      %154 = vector.broadcast %151 : vector<2x1x96xf32> to vector<2x128x96xf32>
      %155 = arith.mulf %154, %153 : vector<2x128x96xf32>
      %cst_73 = arith.constant dense<0.000000e+00> : vector<2x128xf32>
      %156 = vector.multi_reduction <add>, %155, %cst_73 [2] : vector<2x128x96xf32> to vector<2x128xf32>
      %c0_74 = arith.constant 0 : index
      %c0_75 = arith.constant 0 : index
      %157 = vector.load %arg19[%c0_74, %c0_75] : memref<2x128xf32, #tpu.memory_space<vmem>>, vector<2x128xf32>
      tpu.vector_store %arg19[%c0_74, %c0_75], %156 {strides = array<i32>} : memref<2x128xf32, #tpu.memory_space<vmem>>, vector<2x128xf32>,
    } else {
    }
    return
  }
  func.func @transform_0(%arg0: i32, %arg1: i32) -> (i32, i32, i32) {
    %c0_i32 = arith.constant 0 : i32
    %c0_i32_0 = arith.constant 0 : i32
    %c0_i32_1 = arith.constant 0 : i32
    return %arg0, %c0_i32, %c0_i32_0 : i32, i32, i32
  }
  func.func @transform_1(%arg0: i32, %arg1: i32) -> (i32, i32, i32) {
    %c0_i32 = arith.constant 0 : i32
    %c0_i32_0 = arith.constant 0 : i32
    %c0_i32_1 = arith.constant 0 : i32
    return %arg0, %c0_i32, %c0_i32_0 : i32, i32, i32
  }
  func.func @transform_2(%arg0: i32, %arg1: i32) -> (i32, i32, i32) {
    %c0_i32 = arith.constant 0 : i32
    %c0_i32_0 = arith.constant 0 : i32
    %c0_i32_1 = arith.constant 0 : i32
    return %arg0, %c0_i32, %c0_i32_0 : i32, i32, i32
  }
  func.func @transform_3(%arg0: i32, %arg1: i32) -> (i32, i32) {
    %c0_i32 = arith.constant 0 : i32
    %c0_i32_0 = arith.constant 0 : i32
    return %arg0, %c0_i32 : i32, i32
  }
  func.func @transform_4(%arg0: i32, %arg1: i32) -> (i32, i32, i32) {
    %c0_i32 = arith.constant 0 : i32
    %c0_i32_0 = arith.constant 0 : i32
    %c0_i32_1 = arith.constant 0 : i32
    return %arg0, %c0_i32, %c0_i32_0 : i32, i32, i32
  }
  func.func @transform_5(%arg0: i32, %arg1: i32) -> (i32, i32, i32) {
    %c0_i32 = arith.constant 0 : i32
    %c0_i32_0 = arith.constant 0 : i32
    %c0_i32_1 = arith.constant 0 : i32
    return %arg1, %c0_i32, %c0_i32_0 : i32, i32, i32
  }
  func.func @transform_6(%arg0: i32, %arg1: i32) -> (i32, i32, i32) {
    %c0_i32 = arith.constant 0 : i32
    %c0_i32_0 = arith.constant 0 : i32
    %c0_i32_1 = arith.constant 0 : i32
    return %arg1, %c0_i32, %c0_i32_0 : i32, i32, i32
  }
  func.func @transform_7(%arg0: i32, %arg1: i32) -> (i32, i32, i32) {
    %c0_i32 = arith.constant 0 : i32
    %c0_i32_0 = arith.constant 0 : i32
    %c0_i32_1 = arith.constant 0 : i32
    return %arg1, %c0_i32, %c0_i32_0 : i32, i32, i32
  }
  func.func @transform_8(%arg0: i32, %arg1: i32) -> (i32, i32, i32) {
    %c0_i32 = arith.constant 0 : i32
    %c0_i32_0 = arith.constant 0 : i32
    %c0_i32_1 = arith.constant 0 : i32
    return %arg1, %c0_i32, %c0_i32_0 : i32, i32, i32
  }
  func.func @transform_9(%arg0: i32, %arg1: i32) -> (i32, i32, i32) {
    %c0_i32 = arith.constant 0 : i32
    %c0_i32_0 = arith.constant 0 : i32
    %c0_i32_1 = arith.constant 0 : i32
    return %arg1, %c0_i32, %c0_i32_0 : i32, i32, i32
  }
  func.func @transform_10(%arg0: i32, %arg1: i32) -> (i32, i32, i32) {
    %c0_i32 = arith.constant 0 : i32
    %c0_i32_0 = arith.constant 0 : i32
    %c0_i32_1 = arith.constant 0 : i32
    return %arg1, %c0_i32, %c0_i32_0 : i32, i32, i32
  }
  func.func @transform_11(%arg0: i32, %arg1: i32) -> (i32, i32, i32) {
    %c0_i32 = arith.constant 0 : i32
    %c0_i32_0 = arith.constant 0 : i32
    %c0_i32_1 = arith.constant 0 : i32
    return %arg1, %c0_i32, %c0_i32_0 : i32, i32, i32
  }
  func.func @transform_12(%arg0: i32, %arg1: i32) -> (i32, i32, i32) {
    %c0_i32 = arith.constant 0 : i32
    %c0_i32_0 = arith.constant 0 : i32
    %c0_i32_1 = arith.constant 0 : i32
    return %arg1, %c0_i32, %c0_i32_0 : i32, i32, i32
  }
  func.func @transform_13(%arg0: i32, %arg1: i32) -> (i32, i32, i32) {
    %c0_i32 = arith.constant 0 : i32
    %c0_i32_0 = arith.constant 0 : i32
    %c0_i32_1 = arith.constant 0 : i32
    return %arg1, %c0_i32, %c0_i32_0 : i32, i32, i32
  }
  func.func @transform_14(%arg0: i32, %arg1: i32) -> (i32, i32, i32) {
    %c0_i32 = arith.constant 0 : i32
    %c0_i32_0 = arith.constant 0 : i32
    %c0_i32_1 = arith.constant 0 : i32
    return %arg1, %c0_i32, %c0_i32_0 : i32, i32, i32
  }
  func.func @transform_15(%arg0: i32, %arg1: i32) -> (i32, i32, i32) {
    %c0_i32 = arith.constant 0 : i32
    %c0_i32_0 = arith.constant 0 : i32
    %c0_i32_1 = arith.constant 0 : i32
    return %arg1, %c0_i32, %c0_i32_0 : i32, i32, i32
  }
  func.func @transform_16(%arg0: i32, %arg1: i32) -> (i32, i32, i32) {
    %c0_i32 = arith.constant 0 : i32
    %c0_i32_0 = arith.constant 0 : i32
    %c0_i32_1 = arith.constant 0 : i32
    return %arg1, %c0_i32, %c0_i32_0 : i32, i32, i32
  }
  func.func @transform_17(%arg0: i32, %arg1: i32) -> (i32, i32) {
    %c0_i32 = arith.constant 0 : i32
    %c0_i32_0 = arith.constant 0 : i32
    return %arg0, %c0_i32 : i32, i32
  }
}

</mosaic_0001>

<llo_original>
// kernel: attr_network_forward.1
$region0: #{attr_network_forward.1}
  #allocation0 [shape = 'u32[]', space=smem, size = 0x4, offset = 0x4, fixed_abs, tag = 'smem constant byte address 0x4 - core index']
  #allocation1 [shape = 'u32[144,128]{1,0:T(1,128)}', space=vmem, size = 0x12000, scoped, tag = 'internal scratch']
  #allocation2 [shape = 'f32[16,32]{1,0:T(8,128)}', space=vmem, size = 0x2000, scoped, tag = 'scratch operand']
  %s0 = inlined_call_operand.vmem [shape: f32[2,8,32], index: 0, kind: input, shape index: {}]
  %s1 = inlined_call_operand.vmem [shape: f32[2,1,8], index: 1, kind: input, shape index: {}]
  %s2 = inlined_call_operand.vmem [shape: f32[2,8,2], index: 2, kind: input, shape index: {}]
  %s3 = inlined_call_operand.vmem [shape: f32[2,32], index: 3, kind: input, shape index: {}]
  %s4 = inlined_call_operand.vmem [shape: bf16[2,128,96], index: 4, kind: input, shape index: {}]
  %s5 = inlined_call_operand.vmem [shape: bf16[2,32,96], index: 5, kind: input, shape index: {}]
  %s6 = inlined_call_operand.vmem [shape: f32[2,1,96], index: 6, kind: input, shape index: {}]
  %s7 = inlined_call_operand.vmem [shape: bf16[2,32,32], index: 7, kind: input, shape index: {}]
  %s8 = inlined_call_operand.vmem [shape: f32[2,1,32], index: 8, kind: input, shape index: {}]
  %s9 = inlined_call_operand.vmem [shape: f32[2,1,32], index: 9, kind: input, shape index: {}]
  %s10 = inlined_call_operand.vmem [shape: f32[2,1,32], index: 10, kind: input, shape index: {}]
  %s11 = inlined_call_operand.vmem [shape: bf16[2,32,64], index: 11, kind: input, shape index: {}]
  %s12 = inlined_call_operand.vmem [shape: f32[2,1,64], index: 12, kind: input, shape index: {}]
  %s13 = inlined_call_operand.vmem [shape: bf16[2,64,32], index: 13, kind: input, shape index: {}]
  %s14 = inlined_call_operand.vmem [shape: f32[2,1,32], index: 14, kind: input, shape index: {}]
  %s15 = inlined_call_operand.vmem [shape: f32[2,1,32], index: 15, kind: input, shape index: {}]
  %s16 = inlined_call_operand.vmem [shape: f32[2,1,32], index: 16, kind: input, shape index: {}]
  %s17 = inlined_call_operand.hbm [shape: f32[2,128], index: 17, kind: output, shape index: {}]
  %s18 = sld [smem:[#allocation0]]
  $region109: #{attr_network_forward.1} parent=0
    _
  %s20 = ssub.s32 1, %s18
  %s21 = scalar_select 0, %s20, %s18
  $region1: #{attr_network_forward.1} parent=0
    #allocation3 [shape = 'u8[1024]{0}', space=vmem, size = 0x400, scoped, tag = 'output window, operand 0, single buffered']
    #allocation4 [shape = 's32[2]{0}', space=sflag, size = 0x8, scoped, tag = 'scoped memory for attr_network_forward.1']
    %22 = vsyncpa [#allocation4], 0
    loop: start=0, step=1, limit=4
    $region2: #{attr_network_forward.1} parent=1 // loop_pre_header
      _
    $region3: #{attr_network_forward.1} parent=1 // loop_header
      %s24 = sphi 0, %s28
      %p25 = scmp.ge.s32.totalorder %s24, 4
      %s31 = sphi 0, %s43
      %s32 = sphi 0, %s39
      %s33 = sphi 0, %s31
      %s34 = sphi 0, %s32
      %s35 = sphi 0, %s33
      %s36 = sphi 0, %s34
      %s46 = sphi 0, %s48
      %s49 = sphi 0, %s46
      %s50 = sphi 0, %s49
      %s66 = sphi 0, %s50
      %s72 = sphi 0, %s74
      %s75 = sphi 0, %s72
      %s76 = sphi 0, %s75
      %s92 = sphi 0, %s76
      %s98 = sphi 0, %s100
      %s101 = sphi 0, %s98
      %s102 = sphi 0, %s101
      %s118 = sphi 0, %s102
      %s124 = sphi 0, %s126
      %s127 = sphi 0, %s124
      %s128 = sphi 0, %s127
      %s144 = sphi 0, %s128
      %s150 = sphi 0, %s152
      %s153 = sphi 0, %s150
      %s154 = sphi 0, %s153
      %s170 = sphi 0, %s154
      %s176 = sphi 0, %s178
      %s179 = sphi 0, %s176
      %s180 = sphi 0, %s179
      %s196 = sphi 0, %s180
      %s202 = sphi 0, %s204
      %s205 = sphi 0, %s202
      %s206 = sphi 0, %s205
      %s222 = sphi 0, %s206
      %s228 = sphi 0, %s230
      %s231 = sphi 0, %s228
      %s232 = sphi 0, %s231
      %s248 = sphi 0, %s232
      %s254 = sphi 0, %s256
      %s257 = sphi 0, %s254
      %s258 = sphi 0, %s257
      %s274 = sphi 0, %s258
      %s280 = sphi 0, %s282
      %s283 = sphi 0, %s280
      %s284 = sphi 0, %s283
      %s300 = sphi 0, %s284
      %s306 = sphi 0, %s308
      %s309 = sphi 0, %s306
      %s310 = sphi 0, %s309
      %s326 = sphi 0, %s310
      %s332 = sphi 0, %s334
      %s335 = sphi 0, %s332
      %s336 = sphi 0, %s335
      %s352 = sphi 0, %s336
      %s358 = sphi 0, %s360
      %s361 = sphi 0, %s358
      %s362 = sphi 0, %s361
      %s378 = sphi 0, %s362
      %s384 = sphi 0, %s386
      %s387 = sphi 0, %s384
      %s388 = sphi 0, %s387
      %s404 = sphi 0, %s388
      %s410 = sphi 0, %s412
      %s413 = sphi 0, %s410
      %s414 = sphi 0, %s413
      %s430 = sphi 0, %s414
      %s436 = sphi 0, %s438
      %s439 = sphi 0, %s436
      %s440 = sphi 0, %s439
      %s456 = sphi 0, %s440
      %s462 = sphi 0, %s464
      %s465 = sphi 0, %s462
      %s466 = sphi 0, %s465
      %s482 = sphi 0, %s466
      %s488 = sphi 0, %s490
      %s491 = sphi 0, %s488
      %s492 = sphi 0, %s491
      %s508 = sphi 0, %s492
    $region4: #{attr_network_forward.1} parent=1 // loop_header_branch
      %27 = sbr.rel (%p25) target = $region8
    $region5: #{attr_network_forward.1} parent=1 // loop_body
      %s29 = ssub.s32 %s24, 1
      %s30 = ssub.s32 %s24, 2
      %s37 = sadd.s32 1, %s32
      %p38 = scmp.ge.s32.totalorder %s37, 2
      %s39 = scalar_select %p38, 0, %s37
      %s40 = sadd.s32 1, %s31
      %s41 = scalar_select %p38, %s40, %s31
      %p42 = scmp.ge.s32.totalorder %s41, 1
      %s43 = scalar_select %p42, 0, %s41
      %s44 = ssub.s32 %s31, %s43
      %p45 = scmp.eq.s32.totalorder %s44, 0
      %s47 = sadd.s32 %s46, 1
      %s48 = scalar_select %p45, %s46, %s47
      %p51 = pneg %p45
      %p52 = scmp.eq.s32.totalorder %s24, 1
      %p53 = por %p51, %p52
      %p54 = scmp.ne.s32.totalorder %s46, %s49
      %p55 = scmp.eq.s32.totalorder %s24, 0
      %p56 = por %p54, %p55
      %p57 = scmp.ne.s32.totalorder %s46, %s49
      %p58 = scmp.eq.s32.totalorder %s29, 1
      %p59 = por %p57, %p58
      %p60 = scmp.ne.s32.totalorder %s49, %s50
      %p61 = scmp.eq.s32.totalorder %s29, 0
      %p62 = por %p60, %p61
      %p63 = scmp.ne.s32.totalorder %s49, %s50
      %p64 = scmp.eq.s32.totalorder %s30, 1
      %p65 = por %p63, %p64
      %p67 = scmp.ne.s32.totalorder %s50, %s66
      %p68 = scmp.eq.s32.totalorder %s30, 0
      %p69 = por %p67, %p68
      %s70 = ssub.s32 %s31, %s43
      %p71 = scmp.eq.s32.totalorder %s70, 0
      %s73 = sadd.s32 %s72, 1
      %s74 = scalar_select %p71, %s72, %s73
      %p77 = pneg %p71
      %p78 = scmp.eq.s32.totalorder %s24, 1
      %p79 = por %p77, %p78
      %p80 = scmp.ne.s32.totalorder %s72, %s75
      %p81 = scmp.eq.s32.totalorder %s24, 0
      %p82 = por %p80, %p81
      %p83 = scmp.ne.s32.totalorder %s72, %s75
      %p84 = scmp.eq.s32.totalorder %s29, 1
      %p85 = por %p83, %p84
      %p86 = scmp.ne.s32.totalorder %s75, %s76
      %p87 = scmp.eq.s32.totalorder %s29, 0
      %p88 = por %p86, %p87
      %p89 = scmp.ne.s32.totalorder %s75, %s76
      %p90 = scmp.eq.s32.totalorder %s30, 1
      %p91 = por %p89, %p90
      %p93 = scmp.ne.s32.totalorder %s76, %s92
      %p94 = scmp.eq.s32.totalorder %s30, 0
      %p95 = por %p93, %p94
      %s96 = ssub.s32 %s31, %s43
      %p97 = scmp.eq.s32.totalorder %s96, 0
      %s99 = sadd.s32 %s98, 1
      %s100 = scalar_select %p97, %s98, %s99
      %p103 = pneg %p97
      %p104 = scmp.eq.s32.totalorder %s24, 1
      %p105 = por %p103, %p104
      %p106 = scmp.ne.s32.totalorder %s98, %s101
      %p107 = scmp.eq.s32.totalorder %s24, 0
      %p108 = por %p106, %p107
      %p109 = scmp.ne.s32.totalorder %s98, %s101
      %p110 = scmp.eq.s32.totalorder %s29, 1
      %p111 = por %p109, %p110
      %p112 = scmp.ne.s32.totalorder %s101, %s102
      %p113 = scmp.eq.s32.totalorder %s29, 0
      %p114 = por %p112, %p113
      %p115 = scmp.ne.s32.totalorder %s101, %s102
      %p116 = scmp.eq.s32.totalorder %s30, 1
      %p117 = por %p115, %p116
      %p119 = scmp.ne.s32.totalorder %s102, %s118
      %p120 = scmp.eq.s32.totalorder %s30, 0
      %p121 = por %p119, %p120
      %s122 = ssub.s32 %s31, %s43
      %p123 = scmp.eq.s32.totalorder %s122, 0
      %s125 = sadd.s32 %s124, 1
      %s126 = scalar_select %p123, %s124, %s125
      %p129 = pneg %p123
      %p130 = scmp.eq.s32.totalorder %s24, 1
      %p131 = por %p129, %p130
      %p132 = scmp.ne.s32.totalorder %s124, %s127
      %p133 = scmp.eq.s32.totalorder %s24, 0
      %p134 = por %p132, %p133
      %p135 = scmp.ne.s32.totalorder %s124, %s127
      %p136 = scmp.eq.s32.totalorder %s29, 1
      %p137 = por %p135, %p136
      %p138 = scmp.ne.s32.totalorder %s127, %s128
      %p139 = scmp.eq.s32.totalorder %s29, 0
      %p140 = por %p138, %p139
      %p141 = scmp.ne.s32.totalorder %s127, %s128
      %p142 = scmp.eq.s32.totalorder %s30, 1
      %p143 = por %p141, %p142
      %p145 = scmp.ne.s32.totalorder %s128, %s144
      %p146 = scmp.eq.s32.totalorder %s30, 0
      %p147 = por %p145, %p146
      %s148 = ssub.s32 %s31, %s43
      %p149 = scmp.eq.s32.totalorder %s148, 0
      %s151 = sadd.s32 %s150, 1
      %s152 = scalar_select %p149, %s150, %s151
      %p155 = pneg %p149
      %p156 = scmp.eq.s32.totalorder %s24, 1
      %p157 = por %p155, %p156
      %p158 = scmp.ne.s32.totalorder %s150, %s153
      %p159 = scmp.eq.s32.totalorder %s24, 0
      %p160 = por %p158, %p159
      %p161 = scmp.ne.s32.totalorder %s150, %s153
      %p162 = scmp.eq.s32.totalorder %s29, 1
      %p163 = por %p161, %p162
      %p164 = scmp.ne.s32.totalorder %s153, %s154
      %p165 = scmp.eq.s32.totalorder %s29, 0
      %p166 = por %p164, %p165
      %p167 = scmp.ne.s32.totalorder %s153, %s154
      %p168 = scmp.eq.s32.totalorder %s30, 1
      %p169 = por %p167, %p168
      %p171 = scmp.ne.s32.totalorder %s154, %s170
      %p172 = scmp.eq.s32.totalorder %s30, 0
      %p173 = por %p171, %p172
      %s174 = ssub.s32 %s32, %s39
      %p175 = scmp.eq.s32.totalorder %s174, 0
      %s177 = sadd.s32 %s176, 1
      %s178 = scalar_select %p175, %s176, %s177
      %p181 = pneg %p175
      %p182 = scmp.eq.s32.totalorder %s24, 1
      %p183 = por %p181, %p182
      %p184 = scmp.ne.s32.totalorder %s176, %s179
      %p185 = scmp.eq.s32.totalorder %s24, 0
      %p186 = por %p184, %p185
      %p187 = scmp.ne.s32.totalorder %s176, %s179
      %p188 = scmp.eq.s32.totalorder %s29, 1
      %p189 = por %p187, %p188
      %p190 = scmp.ne.s32.totalorder %s179, %s180
      %p191 = scmp.eq.s32.totalorder %s29, 0
      %p192 = por %p190, %p191
      %p193 = scmp.ne.s32.totalorder %s179, %s180
      %p194 = scmp.eq.s32.totalorder %s30, 1
      %p195 = por %p193, %p194
      %p197 = scmp.ne.s32.totalorder %s180, %s196
      %p198 = scmp.eq.s32.totalorder %s30, 0
      %p199 = por %p197, %p198
      %s200 = ssub.s32 %s32, %s39
      %p201 = scmp.eq.s32.totalorder %s200, 0
      %s203 = sadd.s32 %s202, 1
      %s204 = scalar_select %p201, %s202, %s203
      %p207 = pneg %p201
      %p208 = scmp.eq.s32.totalorder %s24, 1
      %p209 = por %p207, %p208
      %p210 = scmp.ne.s32.totalorder %s202, %s205
      %p211 = scmp.eq.s32.totalorder %s24, 0
      %p212 = por %p210, %p211
      %p213 = scmp.ne.s32.totalorder %s202, %s205
      %p214 = scmp.eq.s32.totalorder %s29, 1
      %p215 = por %p213, %p214
      %p216 = scmp.ne.s32.totalorder %s205, %s206
      %p217 = scmp.eq.s32.totalorder %s29, 0
      %p218 = por %p216, %p217
      %p219 = scmp.ne.s32.totalorder %s205, %s206
      %p220 = scmp.eq.s32.totalorder %s30, 1
      %p221 = por %p219, %p220
      %p223 = scmp.ne.s32.totalorder %s206, %s222
      %p224 = scmp.eq.s32.totalorder %s30, 0
      %p225 = por %p223, %p224
      %s226 = ssub.s32 %s32, %s39
      %p227 = scmp.eq.s32.totalorder %s226, 0
      %s229 = sadd.s32 %s228, 1
      %s230 = scalar_select %p227, %s228, %s229
      %p233 = pneg %p227
      %p234 = scmp.eq.s32.totalorder %s24, 1
      %p235 = por %p233, %p234
      %p236 = scmp.ne.s32.totalorder %s228, %s231
      %p237 = scmp.eq.s32.totalorder %s24, 0
      %p238 = por %p236, %p237
      %p239 = scmp.ne.s32.totalorder %s228, %s231
      %p240 = scmp.eq.s32.totalorder %s29, 1
      %p241 = por %p239, %p240
      %p242 = scmp.ne.s32.totalorder %s231, %s232
      %p243 = scmp.eq.s32.totalorder %s29, 0
      %p244 = por %p242, %p243
      %p245 = scmp.ne.s32.totalorder %s231, %s232
      %p246 = scmp.eq.s32.totalorder %s30, 1
      %p247 = por %p245, %p246
      %p249 = scmp.ne.s32.totalorder %s232, %s248
      %p250 = scmp.eq.s32.totalorder %s30, 0
      %p251 = por %p249, %p250
      %s252 = ssub.s32 %s32, %s39
      %p253 = scmp.eq.s32.totalorder %s252, 0
      %s255 = sadd.s32 %s254, 1
      %s256 = scalar_select %p253, %s254, %s255
      %p259 = pneg %p253
      %p260 = scmp.eq.s32.totalorder %s24, 1
      %p261 = por %p259, %p260
      %p262 = scmp.ne.s32.totalorder %s254, %s257
      %p263 = scmp.eq.s32.totalorder %s24, 0
      %p264 = por %p262, %p263
      %p265 = scmp.ne.s32.totalorder %s254, %s257
      %p266 = scmp.eq.s32.totalorder %s29, 1
      %p267 = por %p265, %p266
      %p268 = scmp.ne.s32.totalorder %s257, %s258
      %p269 = scmp.eq.s32.totalorder %s29, 0
      %p270 = por %p268, %p269
      %p271 = scmp.ne.s32.totalorder %s257, %s258
      %p272 = scmp.eq.s32.totalorder %s30, 1
      %p273 = por %p271, %p272
      %p275 = scmp.ne.s32.totalorder %s258, %s274
      %p276 = scmp.eq.s32.totalorder %s30, 0
      %p277 = por %p275, %p276
      %s278 = ssub.s32 %s32, %s39
      %p279 = scmp.eq.s32.totalorder %s278, 0
      %s281 = sadd.s32 %s280, 1
      %s282 = scalar_select %p279, %s280, %s281
      %p285 = pneg %p279
      %p286 = scmp.eq.s32.totalorder %s24, 1
      %p287 = por %p285, %p286
      %p288 = scmp.ne.s32.totalorder %s280, %s283
      %p289 = scmp.eq.s32.totalorder %s24, 0
      %p290 = por %p288, %p289
      %p291 = scmp.ne.s32.totalorder %s280, %s283
      %p292 = scmp.eq.s32.totalorder %s29, 1
      %p293 = por %p291, %p292
      %p294 = scmp.ne.s32.totalorder %s283, %s284
      %p295 = scmp.eq.s32.totalorder %s29, 0
      %p296 = por %p294, %p295
      %p297 = scmp.ne.s32.totalorder %s283, %s284
      %p298 = scmp.eq.s32.totalorder %s30, 1
      %p299 = por %p297, %p298
      %p301 = scmp.ne.s32.totalorder %s284, %s300
      %p302 = scmp.eq.s32.totalorder %s30, 0
      %p303 = por %p301, %p302
      %s304 = ssub.s32 %s32, %s39
      %p305 = scmp.eq.s32.totalorder %s304, 0
      %s307 = sadd.s32 %s306, 1
      %s308 = scalar_select %p305, %s306, %s307
      %p311 = pneg %p305
      %p312 = scmp.eq.s32.totalorder %s24, 1
      %p313 = por %p311, %p312
      %p314 = scmp.ne.s32.totalorder %s306, %s309
      %p315 = scmp.eq.s32.totalorder %s24, 0
      %p316 = por %p314, %p315
      %p317 = scmp.ne.s32.totalorder %s306, %s309
      %p318 = scmp.eq.s32.totalorder %s29, 1
      %p319 = por %p317, %p318
      %p320 = scmp.ne.s32.totalorder %s309, %s310
      %p321 = scmp.eq.s32.totalorder %s29, 0
      %p322 = por %p320, %p321
      %p323 = scmp.ne.s32.totalorder %s309, %s310
      %p324 = scmp.eq.s32.totalorder %s30, 1
      %p325 = por %p323, %p324
      %p327 = scmp.ne.s32.totalorder %s310, %s326
      %p328 = scmp.eq.s32.totalorder %s30, 0
      %p329 = por %p327, %p328
      %s330 = ssub.s32 %s32, %s39
      %p331 = scmp.eq.s32.totalorder %s330, 0
      %s333 = sadd.s32 %s332, 1
      %s334 = scalar_select %p331, %s332, %s333
      %p337 = pneg %p331
      %p338 = scmp.eq.s32.totalorder %s24, 1
      %p339 = por %p337, %p338
      %p340 = scmp.ne.s32.totalorder %s332, %s335
      %p341 = scmp.eq.s32.totalorder %s24, 0
      %p342 = por %p340, %p341
      %p343 = scmp.ne.s32.totalorder %s332, %s335
      %p344 = scmp.eq.s32.totalorder %s29, 1
      %p345 = por %p343, %p344
      %p346 = scmp.ne.s32.totalorder %s335, %s336
      %p347 = scmp.eq.s32.totalorder %s29, 0
      %p348 = por %p346, %p347
      %p349 = scmp.ne.s32.totalorder %s335, %s336
      %p350 = scmp.eq.s32.totalorder %s30, 1
      %p351 = por %p349, %p350
      %p353 = scmp.ne.s32.totalorder %s336, %s352
      %p354 = scmp.eq.s32.totalorder %s30, 0
      %p355 = por %p353, %p354
      %s356 = ssub.s32 %s32, %s39
      %p357 = scmp.eq.s32.totalorder %s356, 0
      %s359 = sadd.s32 %s358, 1
      %s360 = scalar_select %p357, %s358, %s359
      %p363 = pneg %p357
      %p364 = scmp.eq.s32.totalorder %s24, 1
      %p365 = por %p363, %p364
      %p366 = scmp.ne.s32.totalorder %s358, %s361
      %p367 = scmp.eq.s32.totalorder %s24, 0
      %p368 = por %p366, %p367
      %p369 = scmp.ne.s32.totalorder %s358, %s361
      %p370 = scmp.eq.s32.totalorder %s29, 1
      %p371 = por %p369, %p370
      %p372 = scmp.ne.s32.totalorder %s361, %s362
      %p373 = scmp.eq.s32.totalorder %s29, 0
      %p374 = por %p372, %p373
      %p375 = scmp.ne.s32.totalorder %s361, %s362
      %p376 = scmp.eq.s32.totalorder %s30, 1
      %p377 = por %p375, %p376
      %p379 = scmp.ne.s32.totalorder %s362, %s378
      %p380 = scmp.eq.s32.totalorder %s30, 0
      %p381 = por %p379, %p380
      %s382 = ssub.s32 %s32, %s39
      %p383 = scmp.eq.s32.totalorder %s382, 0
      %s385 = sadd.s32 %s384, 1
      %s386 = scalar_select %p383, %s384, %s385
      %p389 = pneg %p383
      %p390 = scmp.eq.s32.totalorder %s24, 1
      %p391 = por %p389, %p390
      %p392 = scmp.ne.s32.totalorder %s384, %s387
      %p393 = scmp.eq.s32.totalorder %s24, 0
      %p394 = por %p392, %p393
      %p395 = scmp.ne.s32.totalorder %s384, %s387
      %p396 = scmp.eq.s32.totalorder %s29, 1
      %p397 = por %p395, %p396
      %p398 = scmp.ne.s32.totalorder %s387, %s388
      %p399 = scmp.eq.s32.totalorder %s29, 0
      %p400 = por %p398, %p399
      %p401 = scmp.ne.s32.totalorder %s387, %s388
      %p402 = scmp.eq.s32.totalorder %s30, 1
      %p403 = por %p401, %p402
      %p405 = scmp.ne.s32.totalorder %s388, %s404
      %p406 = scmp.eq.s32.totalorder %s30, 0
      %p407 = por %p405, %p406
      %s408 = ssub.s32 %s32, %s39
      %p409 = scmp.eq.s32.totalorder %s408, 0
      %s411 = sadd.s32 %s410, 1
      %s412 = scalar_select %p409, %s410, %s411
      %p415 = pneg %p409
      %p416 = scmp.eq.s32.totalorder %s24, 1
      %p417 = por %p415, %p416
      %p418 = scmp.ne.s32.totalorder %s410, %s413
      %p419 = scmp.eq.s32.totalorder %s24, 0
      %p420 = por %p418, %p419
      %p421 = scmp.ne.s32.totalorder %s410, %s413
      %p422 = scmp.eq.s32.totalorder %s29, 1
      %p423 = por %p421, %p422
      %p424 = scmp.ne.s32.totalorder %s413, %s414
      %p425 = scmp.eq.s32.totalorder %s29, 0
      %p426 = por %p424, %p425
      %p427 = scmp.ne.s32.totalorder %s413, %s414
      %p428 = scmp.eq.s32.totalorder %s30, 1
      %p429 = por %p427, %p428
      %p431 = scmp.ne.s32.totalorder %s414, %s430
      %p432 = scmp.eq.s32.totalorder %s30, 0
      %p433 = por %p431, %p432
      %s434 = ssub.s32 %s32, %s39
      %p435 = scmp.eq.s32.totalorder %s434, 0
      %s437 = sadd.s32 %s436, 1
      %s438 = scalar_select %p435, %s436, %s437
      %p441 = pneg %p435
      %p442 = scmp.eq.s32.totalorder %s24, 1
      %p443 = por %p441, %p442
      %p444 = scmp.ne.s32.totalorder %s436, %s439
      %p445 = scmp.eq.s32.totalorder %s24, 0
      %p446 = por %p444, %p445
      %p447 = scmp.ne.s32.totalorder %s436, %s439
      %p448 = scmp.eq.s32.totalorder %s29, 1
      %p449 = por %p447, %p448
      %p450 = scmp.ne.s32.totalorder %s439, %s440
      %p451 = scmp.eq.s32.totalorder %s29, 0
      %p452 = por %p450, %p451
      %p453 = scmp.ne.s32.totalorder %s439, %s440
      %p454 = scmp.eq.s32.totalorder %s30, 1
      %p455 = por %p453, %p454
      %p457 = scmp.ne.s32.totalorder %s440, %s456
      %p458 = scmp.eq.s32.totalorder %s30, 0
      %p459 = por %p457, %p458
      %s460 = ssub.s32 %s32, %s39
      %p461 = scmp.eq.s32.totalorder %s460, 0
      %s463 = sadd.s32 %s462, 1
      %s464 = scalar_select %p461, %s462, %s463
      %p467 = pneg %p461
      %p468 = scmp.eq.s32.totalorder %s24, 1
      %p469 = por %p467, %p468
      %p470 = scmp.ne.s32.totalorder %s462, %s465
      %p471 = scmp.eq.s32.totalorder %s24, 0
      %p472 = por %p470, %p471
      %p473 = scmp.ne.s32.totalorder %s462, %s465
      %p474 = scmp.eq.s32.totalorder %s29, 1
      %p475 = por %p473, %p474
      %p476 = scmp.ne.s32.totalorder %s465, %s466
      %p477 = scmp.eq.s32.totalorder %s29, 0
      %p478 = por %p476, %p477
      %p479 = scmp.ne.s32.totalorder %s465, %s466
      %p480 = scmp.eq.s32.totalorder %s30, 1
      %p481 = por %p479, %p480
      %p483 = scmp.ne.s32.totalorder %s466, %s482
      %p484 = scmp.eq.s32.totalorder %s30, 0
      %p485 = por %p483, %p484
      %s486 = ssub.s32 %s31, %s43
      %p487 = scmp.eq.s32.totalorder %s486, 0
      %s489 = sadd.s32 %s488, 1
      %s490 = scalar_select %p487, %s488, %s489
      %p493 = pneg %p487
      %p494 = scmp.eq.s32.totalorder %s24, 1
      %p495 = por %p493, %p494
      %p496 = scmp.ne.s32.totalorder %s488, %s491
      %p497 = scmp.eq.s32.totalorder %s24, 0
      %p498 = por %p496, %p497
      %p499 = scmp.ne.s32.totalorder %s488, %s491
      %p500 = scmp.eq.s32.totalorder %s29, 1
      %p501 = por %p499, %p500
      %p502 = scmp.ne.s32.totalorder %s491, %s492
      %p503 = scmp.eq.s32.totalorder %s29, 0
      %p504 = por %p502, %p503
      %p505 = scmp.ne.s32.totalorder %s491, %s492
      %p506 = scmp.eq.s32.totalorder %s30, 1
      %p507 = por %p505, %p506
      %p509 = scmp.ne.s32.totalorder %s492, %s508
      %p510 = scmp.eq.s32.totalorder %s30, 0
      %p511 = por %p509, %p510
      %p512 = scmp.le.s32.totalorder 1, %s24
      %p513 = scmp.lt.s32.totalorder %s24, 3
      %p514 = pnand %p512, %p513
      %p515 = pneg %p514
      // Predicated region
      $region9: #{attr_network_forward.1} parent=5 // pred_check
        _
      $region10: #{attr_network_forward.1} parent=5 // pred_check_branch
        %517 = sbr.rel (%p514) target = $region12
      $region11: #{attr_network_forward.1} parent=5 // pred_region
        %s518 = ssub.s32 %s24, 1
        // Predicated region
        $region13: #{attr_network_forward.1} parent=11 // pred_check
          %p519 = pneg %p62
        $region14: #{attr_network_forward.1} parent=11 // pred_check_branch
          %521 = sbr.rel (%p519) target = $region16
        $region15: #{attr_network_forward.1} parent=11 // pred_region
          %s522 = smul.u32 2, %s33
          %p523 = scmp.lt.s32.totalorder %s522, 1
          %s524 = scalar_select %p523, %s522, 1
          %s525 = smul.addr %s524, 8
          %s526 = scalar_lea.vmem %s0, %s525
          %s527 = smul.u32 2, %s33
        $region16: #{attr_network_forward.1} parent=11 // pred_fallthru
          _
        // Predicated region
        $region17: #{attr_network_forward.1} parent=11 // pred_check
          %p528 = pneg %p88
        $region18: #{attr_network_forward.1} parent=11 // pred_check_branch
          %530 = sbr.rel (%p528) target = $region20
        $region19: #{attr_network_forward.1} parent=11 // pred_region
          %s531 = smul.u32 2, %s33
          %p532 = scmp.lt.s32.totalorder %s531, 1
          %s533 = scalar_select %p532, %s531, 1
          %s534 = scalar_lea.vmem %s1, %s533
          %s535 = smul.u32 2, %s33
        $region20: #{attr_network_forward.1} parent=11 // pred_fallthru
          _
        // Predicated region
        $region21: #{attr_network_forward.1} parent=11 // pred_check
          %p536 = pneg %p114
        $region22: #{attr_network_forward.1} parent=11 // pred_check_branch
          %538 = sbr.rel (%p536) target = $region24
        $region23: #{attr_network_forward.1} parent=11 // pred_region
          %s539 = smul.u32 2, %s33
          %p540 = scmp.lt.s32.totalorder %s539, 1
          %s541 = scalar_select %p540, %s539, 1
          %s542 = smul.addr %s541, 8
          %s543 = scalar_lea.vmem %s2, %s542
          %s544 = smul.u32 2, %s33
        $region24: #{attr_network_forward.1} parent=11 // pred_fallthru
          _
        // Predicated region
        $region25: #{attr_network_forward.1} parent=11 // pred_check
          %p545 = pneg %p140
        $region26: #{attr_network_forward.1} parent=11 // pred_check_branch
          %547 = sbr.rel (%p545) target = $region28
        $region27: #{attr_network_forward.1} parent=11 // pred_region
          %p548 = scmp.lt.s32.totalorder %s33, 0
          %s549 = scalar_select %p548, %s33, 0
          %s550 = smul.addr %s549, 2
          %s551 = scalar_lea.vmem %s3, %s550
        $region28: #{attr_network_forward.1} parent=11 // pred_fallthru
          _
        // Predicated region
        $region29: #{attr_network_forward.1} parent=11 // pred_check
          %p552 = pneg %p166
        $region30: #{attr_network_forward.1} parent=11 // pred_check_branch
          %554 = sbr.rel (%p552) target = $region32
        $region31: #{attr_network_forward.1} parent=11 // pred_region
          %s555 = smul.u32 2, %s33
          %p556 = scmp.lt.s32.totalorder %s555, 1
          %s557 = scalar_select %p556, %s555, 1
          %s558 = smul.addr %s557, 16
          %s559 = smul.addr %s558, 4
          %s560 = scalar_lea.vmem %s4, %s559
          %s561 = smul.u32 2, %s33
        $region32: #{attr_network_forward.1} parent=11 // pred_fallthru
          _
      $region12: #{attr_network_forward.1} parent=5 // pred_fallthru
        _
      %p562 = scmp.lt.s32.totalorder %s24, 2
      // Predicated region
      $region33: #{attr_network_forward.1} parent=5 // pred_check
        %p563 = pneg %p562
      $region34: #{attr_network_forward.1} parent=5 // pred_check_branch
        %565 = sbr.rel (%p563) target = $region36
      $region35: #{attr_network_forward.1} parent=5 // pred_region
        // Predicated region
        $region37: #{attr_network_forward.1} parent=35 // pred_check
          %p566 = pneg %p186
        $region38: #{attr_network_forward.1} parent=35 // pred_check_branch
          %568 = sbr.rel (%p566) target = $region40
        $region39: #{attr_network_forward.1} parent=35 // pred_region
          %p569 = scmp.lt.s32.totalorder %s32, 1
          %s570 = scalar_select %p569, %s32, 1
          %s571 = smul.addr %s570, 4
          %s572 = smul.addr %s571, 4
          %s573 = scalar_lea.vmem %s5, %s572
        $region40: #{attr_network_forward.1} parent=35 // pred_fallthru
          _
        // Predicated region
        $region41: #{attr_network_forward.1} parent=35 // pred_check
          %p574 = pneg %p212
        $region42: #{attr_network_forward.1} parent=35 // pred_check_branch
          %576 = sbr.rel (%p574) target = $region44
        $region43: #{attr_network_forward.1} parent=35 // pred_region
          %p577 = scmp.lt.s32.totalorder %s32, 1
          %s578 = scalar_select %p577, %s32, 1
          %s579 = scalar_lea.vmem %s6, %s578
        $region44: #{attr_network_forward.1} parent=35 // pred_fallthru
          _
        // Predicated region
        $region45: #{attr_network_forward.1} parent=35 // pred_check
          %p580 = pneg %p238
        $region46: #{attr_network_forward.1} parent=35 // pred_check_branch
          %582 = sbr.rel (%p580) target = $region48
        $region47: #{attr_network_forward.1} parent=35 // pred_region
          %p583 = scmp.lt.s32.totalorder %s32, 1
          %s584 = scalar_select %p583, %s32, 1
          %s585 = smul.addr %s584, 4
          %s586 = smul.addr %s585, 4
          %s587 = scalar_lea.vmem %s7, %s586
        $region48: #{attr_network_forward.1} parent=35 // pred_fallthru
          _
        // Predicated region
        $region49: #{attr_network_forward.1} parent=35 // pred_check
          %p588 = pneg %p264
        $region50: #{attr_network_forward.1} parent=35 // pred_check_branch
          %590 = sbr.rel (%p588) target = $region52
        $region51: #{attr_network_forward.1} parent=35 // pred_region
          %p591 = scmp.lt.s32.totalorder %s32, 1
          %s592 = scalar_select %p591, %s32, 1
          %s593 = scalar_lea.vmem %s8, %s592
        $region52: #{attr_network_forward.1} parent=35 // pred_fallthru
          _
        // Predicated region
        $region53: #{attr_network_forward.1} parent=35 // pred_check
          %p594 = pneg %p290
        $region54: #{attr_network_forward.1} parent=35 // pred_check_branch
          %596 = sbr.rel (%p594) target = $region56
        $region55: #{attr_network_forward.1} parent=35 // pred_region
          %p597 = scmp.lt.s32.totalorder %s32, 1
          %s598 = scalar_select %p597, %s32, 1
          %s599 = scalar_lea.vmem %s9, %s598
        $region56: #{attr_network_forward.1} parent=35 // pred_fallthru
          _
        // Predicated region
        $region57: #{attr_network_forward.1} parent=35 // pred_check
          %p600 = pneg %p316
        $region58: #{attr_network_forward.1} parent=35 // pred_check_branch
          %602 = sbr.rel (%p600) target = $region60
        $region59: #{attr_network_forward.1} parent=35 // pred_region
          %p603 = scmp.lt.s32.totalorder %s32, 1
          %s604 = scalar_select %p603, %s32, 1
          %s605 = scalar_lea.vmem %s10, %s604
        $region60: #{attr_network_forward.1} parent=35 // pred_fallthru
          _
        // Predicated region
        $region61: #{attr_network_forward.1} parent=35 // pred_check
          %p606 = pneg %p342
        $region62: #{attr_network_forward.1} parent=35 // pred_check_branch
          %608 = sbr.rel (%p606) target = $region64
        $region63: #{attr_network_forward.1} parent=35 // pred_region
          %p609 = scmp.lt.s32.totalorder %s32, 1
          %s610 = scalar_select %p609, %s32, 1
          %s611 = smul.addr %s610, 4
          %s612 = smul.addr %s611, 4
          %s613 = scalar_lea.vmem %s11, %s612
        $region64: #{attr_network_forward.1} parent=35 // pred_fallthru
          _
        // Predicated region
        $region65: #{attr_network_forward.1} parent=35 // pred_check
          %p614 = pneg %p368
        $region66: #{attr_network_forward.1} parent=35 // pred_check_branch
          %616 = sbr.rel (%p614) target = $region68
        $region67: #{attr_network_forward.1} parent=35 // pred_region
          %p617 = scmp.lt.s32.totalorder %s32, 1
          %s618 = scalar_select %p617, %s32, 1
          %s619 = scalar_lea.vmem %s12, %s618
        $region68: #{attr_network_forward.1} parent=35 // pred_fallthru
          _
        // Predicated region
        $region69: #{attr_network_forward.1} parent=35 // pred_check
          %p620 = pneg %p394
        $region70: #{attr_network_forward.1} parent=35 // pred_check_branch
          %622 = sbr.rel (%p620) target = $region72
        $region71: #{attr_network_forward.1} parent=35 // pred_region
          %p623 = scmp.lt.s32.totalorder %s32, 1
          %s624 = scalar_select %p623, %s32, 1
          %s625 = smul.addr %s624, 8
          %s626 = smul.addr %s625, 4
          %s627 = scalar_lea.vmem %s13, %s626
        $region72: #{attr_network_forward.1} parent=35 // pred_fallthru
          _
        // Predicated region
        $region73: #{attr_network_forward.1} parent=35 // pred_check
          %p628 = pneg %p420
        $region74: #{attr_network_forward.1} parent=35 // pred_check_branch
          %630 = sbr.rel (%p628) target = $region76
        $region75: #{attr_network_forward.1} parent=35 // pred_region
          %p631 = scmp.lt.s32.totalorder %s32, 1
          %s632 = scalar_select %p631, %s32, 1
          %s633 = scalar_lea.vmem %s14, %s632
        $region76: #{attr_network_forward.1} parent=35 // pred_fallthru
          _
        // Predicated region
        $region77: #{attr_network_forward.1} parent=35 // pred_check
          %p634 = pneg %p446
        $region78: #{attr_network_forward.1} parent=35 // pred_check_branch
          %636 = sbr.rel (%p634) target = $region80
        $region79: #{attr_network_forward.1} parent=35 // pred_region
          %p637 = scmp.lt.s32.totalorder %s32, 1
          %s638 = scalar_select %p637, %s32, 1
          %s639 = scalar_lea.vmem %s15, %s638
        $region80: #{attr_network_forward.1} parent=35 // pred_fallthru
          _
        // Predicated region
        $region81: #{attr_network_forward.1} parent=35 // pred_check
          %p640 = pneg %p472
        $region82: #{attr_network_forward.1} parent=35 // pred_check_branch
          %642 = sbr.rel (%p640) target = $region84
        $region83: #{attr_network_forward.1} parent=35 // pred_region
          %p643 = scmp.lt.s32.totalorder %s32, 1
          %s644 = scalar_select %p643, %s32, 1
          %s645 = scalar_lea.vmem %s16, %s644
        $region84: #{attr_network_forward.1} parent=35 // pred_fallthru
          _
      $region36: #{attr_network_forward.1} parent=5 // pred_fallthru
        _
      %p646 = scmp.le.s32.totalorder 1, %s24
      %p647 = scmp.lt.s32.totalorder %s24, 3
      %p648 = pnand %p646, %p647
      %p649 = pneg %p648
      // Predicated region
      $region85: #{attr_network_forward.1} parent=5 // pred_check
        _
      $region86: #{attr_network_forward.1} parent=5 // pred_check_branch
        %651 = sbr.rel (%p648) target = $region88
      $region87: #{attr_network_forward.1} parent=5 // pred_region
        %s652 = ssub.s32 %s24, 1
        %s653 = smul.u32 2, %s33
        %p654 = scmp.lt.s32.totalorder %s653, 1
        %s655 = scalar_select %p654, %s653, 1
        %s656 = smul.addr %s655, 8
        %s657 = scalar_lea.vmem %s0, %s656
        %p658 = pneg %p62
        %p659 = pneg %p59
        %s660 = smul.u32 2, %s33
        %p661 = scmp.lt.s32.totalorder %s660, 1
        %s662 = scalar_select %p661, %s660, 1
        %s663 = scalar_lea.vmem %s1, %s662
        %p664 = pneg %p88
        %p665 = pneg %p85
        %s666 = smul.u32 2, %s33
        %p667 = scmp.lt.s32.totalorder %s666, 1
        %s668 = scalar_select %p667, %s666, 1
        %s669 = smul.addr %s668, 8
        %s670 = scalar_lea.vmem %s2, %s669
        %p671 = pneg %p114
        %p672 = pneg %p111
        %p673 = scmp.lt.s32.totalorder %s33, 0
        %s674 = scalar_select %p673, %s33, 0
        %s675 = smul.addr %s674, 2
        %s676 = scalar_lea.vmem %s3, %s675
        %p677 = pneg %p140
        %p678 = pneg %p137
        %s679 = smul.u32 2, %s33
        %p680 = scmp.lt.s32.totalorder %s679, 1
        %s681 = scalar_select %p680, %s679, 1
        %s682 = smul.addr %s681, 16
        %s683 = smul.addr %s682, 4
        %s684 = scalar_lea.vmem %s4, %s683
        %p685 = pneg %p166
        %p686 = pneg %p163
        %p687 = scmp.lt.s32.totalorder %s34, 1
        %s688 = scalar_select %p687, %s34, 1
        %s689 = smul.addr %s688, 4
        %s690 = smul.addr %s689, 4
        %s691 = scalar_lea.vmem %s5, %s690
        %p692 = pneg %p192
        %p693 = pneg %p189
        %p694 = scmp.lt.s32.totalorder %s34, 1
        %s695 = scalar_select %p694, %s34, 1
        %s696 = scalar_lea.vmem %s6, %s695
        %p697 = pneg %p218
        %p698 = pneg %p215
        %p699 = scmp.lt.s32.totalorder %s34, 1
        %s700 = scalar_select %p699, %s34, 1
        %s701 = smul.addr %s700, 4
        %s702 = smul.addr %s701, 4
        %s703 = scalar_lea.vmem %s7, %s702
        %p704 = pneg %p244
        %p705 = pneg %p241
        %p706 = scmp.lt.s32.totalorder %s34, 1
        %s707 = scalar_select %p706, %s34, 1
        %s708 = scalar_lea.vmem %s8, %s707
        %p709 = pneg %p270
        %p710 = pneg %p267
        %p711 = scmp.lt.s32.totalorder %s34, 1
        %s712 = scalar_select %p711, %s34, 1
        %s713 = scalar_lea.vmem %s9, %s712
        %p714 = pneg %p296
        %p715 = pneg %p293
        %p716 = scmp.lt.s32.totalorder %s34, 1
        %s717 = scalar_select %p716, %s34, 1
        %s718 = scalar_lea.vmem %s10, %s717
        %p719 = pneg %p322
        %p720 = pneg %p319
        %p721 = scmp.lt.s32.totalorder %s34, 1
        %s722 = scalar_select %p721, %s34, 1
        %s723 = smul.addr %s722, 4
        %s724 = smul.addr %s723, 4
        %s725 = scalar_lea.vmem %s11, %s724
        %p726 = pneg %p348
        %p727 = pneg %p345
        %p728 = scmp.lt.s32.totalorder %s34, 1
        %s729 = scalar_select %p728, %s34, 1
        %s730 = scalar_lea.vmem %s12, %s729
        %p731 = pneg %p374
        %p732 = pneg %p371
        %p733 = scmp.lt.s32.totalorder %s34, 1
        %s734 = scalar_select %p733, %s34, 1
        %s735 = smul.addr %s734, 8
        %s736 = smul.addr %s735, 4
        %s737 = scalar_lea.vmem %s13, %s736
        %p738 = pneg %p400
        %p739 = pneg %p397
        %p740 = scmp.lt.s32.totalorder %s34, 1
        %s741 = scalar_select %p740, %s34, 1
        %s742 = scalar_lea.vmem %s14, %s741
        %p743 = pneg %p426
        %p744 = pneg %p423
        %p745 = scmp.lt.s32.totalorder %s34, 1
        %s746 = scalar_select %p745, %s34, 1
        %s747 = scalar_lea.vmem %s15, %s746
        %p748 = pneg %p452
        %p749 = pneg %p449
        %p750 = scmp.lt.s32.totalorder %s34, 1
        %s751 = scalar_select %p750, %s34, 1
        %s752 = scalar_lea.vmem %s16, %s751
        %p753 = pneg %p478
        %p754 = pneg %p475
        %p755 = pneg %p504
        %p756 = pneg %p501
        %s757 = smul.u32 2, %s33
        %p758 = scmp.lt.s32.totalorder %s757, 1
        %s759 = scalar_select %p758, %s757, 1
        %s760 = smul.addr %s759, 8
        %s761 = scalar_lea.vmem %s0, %s760
        %s762 = smul.u32 2, %s33
        %s763 = smul.u32 2, %s33
        %p764 = scmp.lt.s32.totalorder %s763, 1
        %s765 = scalar_select %p764, %s763, 1
        %s766 = scalar_lea.vmem %s1, %s765
        %s767 = smul.u32 2, %s33
        %s768 = smul.u32 2, %s33
        %p769 = scmp.lt.s32.totalorder %s768, 1
        %s770 = scalar_select %p769, %s768, 1
        %s771 = smul.addr %s770, 8
        %s772 = scalar_lea.vmem %s2, %s771
        %s773 = smul.u32 2, %s33
        %p774 = scmp.lt.s32.totalorder %s33, 0
        %s775 = scalar_select %p774, %s33, 0
        %s776 = smul.addr %s775, 2
        %s777 = scalar_lea.vmem %s3, %s776
        %s778 = smul.u32 2, %s33
        %p779 = scmp.lt.s32.totalorder %s778, 1
        %s780 = scalar_select %p779, %s778, 1
        %s781 = smul.addr %s780, 16
        %s782 = smul.addr %s781, 4
        %s783 = scalar_lea.vmem %s4, %s782
        %s784 = smul.u32 2, %s33
        %p785 = scmp.lt.s32.totalorder %s34, 1
        %s786 = scalar_select %p785, %s34, 1
        %s787 = smul.addr %s786, 4
        %s788 = smul.addr %s787, 4
        %s789 = scalar_lea.vmem %s5, %s788
        %p790 = scmp.lt.s32.totalorder %s34, 1
        %s791 = scalar_select %p790, %s34, 1
        %s792 = scalar_lea.vmem %s6, %s791
        %p793 = scmp.lt.s32.totalorder %s34, 1
        %s794 = scalar_select %p793, %s34, 1
        %s795 = smul.addr %s794, 4
        %s796 = smul.addr %s795, 4
        %s797 = scalar_lea.vmem %s7, %s796
        %p798 = scmp.lt.s32.totalorder %s34, 1
        %s799 = scalar_select %p798, %s34, 1
        %s800 = scalar_lea.vmem %s8, %s799
        %p801 = scmp.lt.s32.totalorder %s34, 1
        %s802 = scalar_select %p801, %s34, 1
        %s803 = scalar_lea.vmem %s9, %s802
        %p804 = scmp.lt.s32.totalorder %s34, 1
        %s805 = scalar_select %p804, %s34, 1
        %s806 = scalar_lea.vmem %s10, %s805
        %p807 = scmp.lt.s32.totalorder %s34, 1
        %s808 = scalar_select %p807, %s34, 1
        %s809 = smul.addr %s808, 4
        %s810 = smul.addr %s809, 4
        %s811 = scalar_lea.vmem %s11, %s810
        %p812 = scmp.lt.s32.totalorder %s34, 1
        %s813 = scalar_select %p812, %s34, 1
        %s814 = scalar_lea.vmem %s12, %s813
        %p815 = scmp.lt.s32.totalorder %s34, 1
        %s816 = scalar_select %p815, %s34, 1
        %s817 = smul.addr %s816, 8
        %s818 = smul.addr %s817, 4
        %s819 = scalar_lea.vmem %s13, %s818
        %p820 = scmp.lt.s32.totalorder %s34, 1
        %s821 = scalar_select %p820, %s34, 1
        %s822 = scalar_lea.vmem %s14, %s821
        %p823 = scmp.lt.s32.totalorder %s34, 1
        %s824 = scalar_select %p823, %s34, 1
        %s825 = scalar_lea.vmem %s15, %s824
        %p826 = scmp.lt.s32.totalorder %s34, 1
        %s827 = scalar_select %p826, %s34, 1
        %s828 = scalar_lea.vmem %s16, %s827
        %p830 = scmp.eq.s32.totalorder %s34, 0
        // Predicated region
        $region89: #{attr_network_forward.1} parent=87 // pred_check
          %p831 = pneg %p830
        $region90: #{attr_network_forward.1} parent=87 // pred_check_branch
          %833 = sbr.rel (%p831) target = $region92
        $region91: #{attr_network_forward.1} parent=87 // pred_region
          %v834 = vld [vmem:[%s761] sm:$0xff]
          %v835 = vld [vmem:[%s761 + $0x8] sm:$0xff]
          %vm836 = vcmask 261120
          %837 = vst.msk [vmem:[#allocation2] sm:$0xff] %vm836, %v834
          %838 = vst.msk [vmem:[#allocation2 + $0x8] sm:$0xff] %vm836, %v835
        $region92: #{attr_network_forward.1} parent=87 // pred_fallthru
          _
        %v839 = vld [vmem:[#allocation2] sm:$0xff]
        %v840 = vld [vmem:[#allocation2 + $0x8] sm:$0xff]
        %v841 = vpack.c.bf16 %v840, %v839
        %v842 = vld [vmem:[%s789] sm:$0xf]
        %v843 = vld [vmem:[%s789 + $0x4] sm:$0xf]
        %v844 = vld [vmem:[%s789 + $0x8] sm:$0xf]
        %v845 = vld [vmem:[%s789 + $0xc] sm:$0xf]
        %v846 = vld [vmem:[%s792] sm:$0x1]
        %v848 = vlaneseq
        %v849 = vshrl.u32 %v848, 7
        %v850 = vsub.s32 0, %v849
        %v851 = vrot.slane %v846, %v850
        %v857 = vunpack.c.l.b16 %v842
        %v858 = vunpack.c.l.b16 %v843
        %v859 = vunpack.c.l.b16 %v844
        %v860 = vunpack.c.l.b16 %v845
        %v861 = vpack.c.b16 %v858, %v857
        %v862 = vpack.c.b16 %v860, %v859
        %vm865 = vcmask 261120
        %v867 = vsel %vm865, %v841, 0
        %869 = vmatprep.subr.bf16.mxu0 0
        %870 = vmatpush1.bf16.msra.mxu0 %v861
        %871 = vmatprep.subr.bf16.mxu0 0
        %872 = vmatpush1.bf16.msra.mxu0 %v862
        %873 = vmatprep.subr.bf16.mxu0 0
        %874 = vmatpush1.bf16.msra.mxu0 0
        %875 = vmatprep.subr.bf16.mxu0 0
        %876 = vmatpush1.bf16.msra.mxu0 0
        %877 = vmatprep.subr.bf16.mxu0 0
        %878 = vmatpush1.bf16.msra.mxu0 0
        %879 = vmatprep.subr.bf16.mxu0 0
        %880 = vmatpush1.bf16.msra.mxu0 0
        %881 = vmatprep.subr.bf16.mxu0 0
        %882 = vmatpush1.bf16.msra.mxu0 0
        %883 = vmatprep.subr.bf16.mxu0 0
        %884 = vmatpush1.bf16.msra.mxu0 0
        %885 = vmatprep.subr.bf16.mxu0 0
        %886 = vmatpush1.bf16.msra.mxu0 0
        %887 = vmatprep.subr.bf16.mxu0 0
        %888 = vmatpush1.bf16.msra.mxu0 0
        %889 = vmatprep.subr.bf16.mxu0 0
        %890 = vmatpush1.bf16.msra.mxu0 0
        %891 = vmatprep.subr.bf16.mxu0 0
        %892 = vmatpush1.bf16.msra.mxu0 0
        %893 = vmatprep.subr.bf16.mxu0 0
        %894 = vmatpush1.bf16.msra.mxu0 0
        %895 = vmatprep.subr.bf16.mxu0 0
        %896 = vmatpush1.bf16.msra.mxu0 0
        %897 = vmatprep.subr.bf16.mxu0 0
        %898 = vmatpush1.bf16.msra.mxu0 0
        %899 = vmatprep.subr.bf16.mxu0 0
        %900 = vmatpush1.bf16.msra.mxu0 0
        %901 = vmatprep.mubr.bf16.mxu0 0
        %902 = vmatmul.mubr.bf16.gmra.mrb[0].mxu0 %v867
        %v903 = vpop.f32.mrb[0].mxu0
        %v904 = vadd.f32 %v851, %v903
        %v905 = vpop.f32.mrb[0].mxu0
        %v906 = vpop.f32.mrb[0].mxu0
        %v907 = vadd.f32 %v851, %v906
        %v908 = vpop.f32.mrb[0].mxu0
        %909 = vdwg.mxu0
        %v910 = vmul.f32 %v904, 0.25
        %v911 = vmul.f32 %v907, 0.25
        %914 = vrot.lane.b32.xlu0 %v910, 112
        %v915 = vpop.permute.xlu0 %914
        %916 = vrot.lane.b32.xlu0 %v911, 112
        %v917 = vpop.permute.xlu0 %916
        %v920 = vpack.c.bf16 %v910, %v910
        %v921 = vpack.c.bf16 %v911, %v911
        %v922 = vpack.c.bf16 %v915, %v915
        %v923 = vpack.c.bf16 %v917, %v917
        %926 = vrot.lane.b32.xlu0 %v904, 112
        %v927 = vpop.permute.xlu0 %926
        %928 = vrot.lane.b32.xlu0 %v907, 112
        %v929 = vpop.permute.xlu0 %928
        %v932 = vpack.c.bf16 %v904, %v904
        %v933 = vpack.c.bf16 %v907, %v907
        %v934 = vpack.c.bf16 %v927, %v927
        %v935 = vpack.c.bf16 %v929, %v929
        %v936 = vld [vmem:[%s766] sm:$0x1]
        %v937 = vld [vmem:[%s766 + $0x1] sm:$0x1]
        %v940 = vlaneseq
        %v941 = vshrl.u32 %v940, 7
        %v942 = vsub.s32 0, %v941
        %v943 = vrot.slane %v936, %v942
        %v944 = vlaneseq
        %v945 = vshrl.u32 %v944, 7
        %v946 = vsub.s32 0, %v945
        %v947 = vrot.slane %v937, %v946
        %951 = vrot.lane.b32.xlu0 %v932, 96
        %v952 = vpop.permute.xlu0 %951
        %vm953 = vcmask 130048
        %v955 = vsel %vm953, %v920, 0
        %v958 = vsel %vm953, %v952, 0
        %960 = vmatprep.subr.bf16.mxu0 0
        %961 = vmatpush1.bf16.xpose.msra.mxu0 %v958
        %962 = vmatprep.subr.bf16.mxu0 0
        %963 = vmatpush1.bf16.xpose.msra.mxu0 0
        %964 = vmatprep.subr.bf16.mxu0 0
        %965 = vmatpush1.bf16.xpose.msra.mxu0 0
        %966 = vmatprep.subr.bf16.mxu0 0
        %967 = vmatpush1.bf16.xpose.msra.mxu0 0
        %968 = vmatprep.subr.bf16.mxu0 0
        %969 = vmatpush1.bf16.xpose.msra.mxu0 0
        %970 = vmatprep.subr.bf16.mxu0 0
        %971 = vmatpush1.bf16.xpose.msra.mxu0 0
        %972 = vmatprep.subr.bf16.mxu0 0
        %973 = vmatpush1.bf16.xpose.msra.mxu0 0
        %974 = vmatprep.subr.bf16.mxu0 0
        %975 = vmatpush1.bf16.xpose.msra.mxu0 0
        %976 = vmatprep.subr.bf16.mxu0 0
        %977 = vmatpush1.bf16.xpose.msra.mxu0 0
        %978 = vmatprep.subr.bf16.mxu0 0
        %979 = vmatpush1.bf16.xpose.msra.mxu0 0
        %980 = vmatprep.subr.bf16.mxu0 0
        %981 = vmatpush1.bf16.xpose.msra.mxu0 0
        %982 = vmatprep.subr.bf16.mxu0 0
        %983 = vmatpush1.bf16.xpose.msra.mxu0 0
        %984 = vmatprep.subr.bf16.mxu0 0
        %985 = vmatpush1.bf16.xpose.msra.mxu0 0
        %986 = vmatprep.subr.bf16.mxu0 0
        %987 = vmatpush1.bf16.xpose.msra.mxu0 0
        %988 = vmatprep.subr.bf16.mxu0 0
        %989 = vmatpush1.bf16.xpose.msra.mxu0 0
        %990 = vmatprep.subr.bf16.mxu0 0
        %991 = vmatpush1.bf16.xpose.msra.mxu0 0
        %992 = vmatprep.mubr.bf16.mxu0 0
        %993 = vmatmul.mubr.bf16.gmra.mrb[0].mxu0 %v955
        %v994 = vpop.f32.mrb[0].mxu0
        %v995 = vadd.f32 %v943, %v994
        %v996 = vpop.f32.mrb[0].mxu0
        %v997 = vpop.f32.mrb[0].mxu0
        %v998 = vpop.f32.mrb[0].mxu0
        %999 = vdwg.mxu0
        %1001 = vrot.lane.b32.xlu0 %v933, 96
        %v1002 = vpop.permute.xlu0 %1001
        %v1004 = vsel %vm953, %v921, 0
        %v1007 = vsel %vm953, %v1002, 0
        %1009 = vmatprep.subr.bf16.mxu0 0
        %1010 = vmatpush1.bf16.xpose.msra.mxu0 %v1007
        %1011 = vmatprep.subr.bf16.mxu0 0
        %1012 = vmatpush1.bf16.xpose.msra.mxu0 0
        %1013 = vmatprep.subr.bf16.mxu0 0
        %1014 = vmatpush1.bf16.xpose.msra.mxu0 0
        %1015 = vmatprep.subr.bf16.mxu0 0
        %1016 = vmatpush1.bf16.xpose.msra.mxu0 0
        %1017 = vmatprep.subr.bf16.mxu0 0
        %1018 = vmatpush1.bf16.xpose.msra.mxu0 0
        %1019 = vmatprep.subr.bf16.mxu0 0
        %1020 = vmatpush1.bf16.xpose.msra.mxu0 0
        %1021 = vmatprep.subr.bf16.mxu0 0
        %1022 = vmatpush1.bf16.xpose.msra.mxu0 0
        %1023 = vmatprep.subr.bf16.mxu0 0
        %1024 = vmatpush1.bf16.xpose.msra.mxu0 0
        %1025 = vmatprep.subr.bf16.mxu0 0
        %1026 = vmatpush1.bf16.xpose.msra.mxu0 0
        %1027 = vmatprep.subr.bf16.mxu0 0
        %1028 = vmatpush1.bf16.xpose.msra.mxu0 0
        %1029 = vmatprep.subr.bf16.mxu0 0
        %1030 = vmatpush1.bf16.xpose.msra.mxu0 0
        %1031 = vmatprep.subr.bf16.mxu0 0
        %1032 = vmatpush1.bf16.xpose.msra.mxu0 0
        %1033 = vmatprep.subr.bf16.mxu0 0
        %1034 = vmatpush1.bf16.xpose.msra.mxu0 0
        %1035 = vmatprep.subr.bf16.mxu0 0
        %1036 = vmatpush1.bf16.xpose.msra.mxu0 0
        %1037 = vmatprep.subr.bf16.mxu0 0
        %1038 = vmatpush1.bf16.xpose.msra.mxu0 0
        %1039 = vmatprep.subr.bf16.mxu0 0
        %1040 = vmatpush1.bf16.xpose.msra.mxu0 0
        %1041 = vmatprep.mubr.bf16.mxu0 0
        %1042 = vmatmul.mubr.bf16.gmra.mrb[0].mxu0 %v1004
        %v1043 = vpop.f32.mrb[0].mxu0
        %v1044 = vadd.f32 %v947, %v1043
        %v1045 = vpop.f32.mrb[0].mxu0
        %v1046 = vpop.f32.mrb[0].mxu0
        %v1047 = vpop.f32.mrb[0].mxu0
        %1048 = vdwg.mxu0
        %1050 = vrot.lane.b32.xlu0 %v934, 96
        %v1051 = vpop.permute.xlu0 %1050
        %v1053 = vsel %vm953, %v922, 0
        %v1056 = vsel %vm953, %v1051, 0
        %1058 = vmatprep.subr.bf16.mxu0 0
        %1059 = vmatpush1.bf16.xpose.msra.mxu0 %v1056
        %1060 = vmatprep.subr.bf16.mxu0 0
        %1061 = vmatpush1.bf16.xpose.msra.mxu0 0
        %1062 = vmatprep.subr.bf16.mxu0 0
        %1063 = vmatpush1.bf16.xpose.msra.mxu0 0
        %1064 = vmatprep.subr.bf16.mxu0 0
        %1065 = vmatpush1.bf16.xpose.msra.mxu0 0
        %1066 = vmatprep.subr.bf16.mxu0 0
        %1067 = vmatpush1.bf16.xpose.msra.mxu0 0
        %1068 = vmatprep.subr.bf16.mxu0 0
        %1069 = vmatpush1.bf16.xpose.msra.mxu0 0
        %1070 = vmatprep.subr.bf16.mxu0 0
        %1071 = vmatpush1.bf16.xpose.msra.mxu0 0
        %1072 = vmatprep.subr.bf16.mxu0 0
        %1073 = vmatpush1.bf16.xpose.msra.mxu0 0
        %1074 = vmatprep.subr.bf16.mxu0 0
        %1075 = vmatpush1.bf16.xpose.msra.mxu0 0
        %1076 = vmatprep.subr.bf16.mxu0 0
        %1077 = vmatpush1.bf16.xpose.msra.mxu0 0
        %1078 = vmatprep.subr.bf16.mxu0 0
        %1079 = vmatpush1.bf16.xpose.msra.mxu0 0
        %1080 = vmatprep.subr.bf16.mxu0 0
        %1081 = vmatpush1.bf16.xpose.msra.mxu0 0
        %1082 = vmatprep.subr.bf16.mxu0 0
        %1083 = vmatpush1.bf16.xpose.msra.mxu0 0
        %1084 = vmatprep.subr.bf16.mxu0 0
        %1085 = vmatpush1.bf16.xpose.msra.mxu0 0
        %1086 = vmatprep.subr.bf16.mxu0 0
        %1087 = vmatpush1.bf16.xpose.msra.mxu0 0
        %1088 = vmatprep.subr.bf16.mxu0 0
        %1089 = vmatpush1.bf16.xpose.msra.mxu0 0
        %1090 = vmatprep.mubr.bf16.mxu0 0
        %1091 = vmatmul.mubr.bf16.gmra.mrb[0].mxu0 %v1053
        %v1092 = vpop.f32.mrb[0].mxu0
        %v1093 = vadd.f32 %v943, %v1092
        %v1094 = vpop.f32.mrb[0].mxu0
        %v1095 = vpop.f32.mrb[0].mxu0
        %v1096 = vpop.f32.mrb[0].mxu0
        %1097 = vdwg.mxu0
        %1099 = vrot.lane.b32.xlu0 %v935, 96
        %v1100 = vpop.permute.xlu0 %1099
        %v1102 = vsel %vm953, %v923, 0
        %v1105 = vsel %vm953, %v1100, 0
        %1107 = vmatprep.subr.bf16.mxu0 0
        %1108 = vmatpush1.bf16.xpose.msra.mxu0 %v1105
        %1109 = vmatprep.subr.bf16.mxu0 0
        %1110 = vmatpush1.bf16.xpose.msra.mxu0 0
        %1111 = vmatprep.subr.bf16.mxu0 0
        %1112 = vmatpush1.bf16.xpose.msra.mxu0 0
        %1113 = vmatprep.subr.bf16.mxu0 0
        %1114 = vmatpush1.bf16.xpose.msra.mxu0 0
        %1115 = vmatprep.subr.bf16.mxu0 0
        %1116 = vmatpush1.bf16.xpose.msra.mxu0 0
        %1117 = vmatprep.subr.bf16.mxu0 0
        %1118 = vmatpush1.bf16.xpose.msra.mxu0 0
        %1119 = vmatprep.subr.bf16.mxu0 0
        %1120 = vmatpush1.bf16.xpose.msra.mxu0 0
        %1121 = vmatprep.subr.bf16.mxu0 0
        %1122 = vmatpush1.bf16.xpose.msra.mxu0 0
        %1123 = vmatprep.subr.bf16.mxu0 0
        %1124 = vmatpush1.bf16.xpose.msra.mxu0 0
        %1125 = vmatprep.subr.bf16.mxu0 0
        %1126 = vmatpush1.bf16.xpose.msra.mxu0 0
        %1127 = vmatprep.subr.bf16.mxu0 0
        %1128 = vmatpush1.bf16.xpose.msra.mxu0 0
        %1129 = vmatprep.subr.bf16.mxu0 0
        %1130 = vmatpush1.bf16.xpose.msra.mxu0 0
        %1131 = vmatprep.subr.bf16.mxu0 0
        %1132 = vmatpush1.bf16.xpose.msra.mxu0 0
        %1133 = vmatprep.subr.bf16.mxu0 0
        %1134 = vmatpush1.bf16.xpose.msra.mxu0 0
        %1135 = vmatprep.subr.bf16.mxu0 0
        %1136 = vmatpush1.bf16.xpose.msra.mxu0 0
        %1137 = vmatprep.subr.bf16.mxu0 0
        %1138 = vmatpush1.bf16.xpose.msra.mxu0 0
        %1139 = vmatprep.mubr.bf16.mxu0 0
        %1140 = vmatmul.mubr.bf16.gmra.mrb[0].mxu0 %v1102
        %v1141 = vpop.f32.mrb[0].mxu0
        %v1142 = vadd.f32 %v947, %v1141
        %v1143 = vpop.f32.mrb[0].mxu0
        %v1144 = vpop.f32.mrb[0].mxu0
        %v1145 = vpop.f32.mrb[0].mxu0
        %1146 = vdwg.mxu0
        %vm1147 = vcmask 64512
        %v1148 = vsel %vm1147, %v995, -inf
        %1149 = vmax.xlane.f32.xlu0 %v1148
        %v1150 = vpop.xlane.xlu0 %1149
        %v1151 = vsel %vm1147, %v1044, -inf
        %1152 = vmax.xlane.f32.xlu0 %v1151
        %v1153 = vpop.xlane.xlu0 %1152
        %v1154 = vsel %vm1147, %v1093, -inf
        %1155 = vmax.xlane.f32.xlu0 %v1154
        %v1156 = vpop.xlane.xlu0 %1155
        %v1157 = vsel %vm1147, %v1142, -inf
        %1158 = vmax.xlane.f32.xlu0 %v1157
        %v1159 = vpop.xlane.xlu0 %1158
        %v1160 = vsub.f32 %v995, %v1150
        %v1161 = vsub.f32 %v1044, %v1153
        %v1162 = vsub.f32 %v1093, %v1156
        %v1163 = vsub.f32 %v1142, %v1159
        %v1164 = vmul.f32 %v1160, 1.442695
        %v1165 = vpow.pop %v1164
        %v1166 = vmul.f32 %v1161, 1.442695
        %v1167 = vpow.pop %v1166
        %v1168 = vmul.f32 %v1162, 1.442695
        %v1169 = vpow.pop %v1168
        %v1170 = vmul.f32 %v1163, 1.442695
        %v1171 = vpow.pop %v1170
        %v1172 = vsel %vm1147, %v1165, 0.0
        %1173 = vadd.xlane.f32.xlu0 %v1172
        %v1174 = vpop.xlane.xlu0 %1173
        %v1175 = vsel %vm1147, %v1167, 0.0
        %1176 = vadd.xlane.f32.xlu0 %v1175
        %v1177 = vpop.xlane.xlu0 %1176
        %v1178 = vsel %vm1147, %v1169, 0.0
        %1179 = vadd.xlane.f32.xlu0 %v1178
        %v1180 = vpop.xlane.xlu0 %1179
        %v1181 = vsel %vm1147, %v1171, 0.0
        %1182 = vadd.xlane.f32.xlu0 %v1181
        %v1183 = vpop.xlane.xlu0 %1182
        %v1184 = vrcp.pop %v1174
        %v1185 = vrcp.pop %v1177
        %v1186 = vrcp.pop %v1180
        %v1187 = vrcp.pop %v1183
        %v1188 = vmul.f32 %v1165, %v1184
        %v1189 = vmul.f32 %v1167, %v1185
        %v1190 = vmul.f32 %v1169, %v1186
        %v1191 = vmul.f32 %v1171, %v1187
        %v1192 = vpack.c.bf16 %v1188, %v1188
        %v1193 = vpack.c.bf16 %v1189, %v1189
        %v1194 = vpack.c.bf16 %v1190, %v1190
        %v1195 = vpack.c.bf16 %v1191, %v1191
        %1196 = vrot.lane.b32.xlu0 %v932, 64
        %v1197 = vpop.permute.xlu0 %1196
        %v1199 = vsel %vm1147, %v1192, 0
        %vm1201 = vcmask 1043456
        %v1203 = vsel %vm1201, %v1197, 0
        %1205 = vmatprep.subr.bf16.mxu0 0
        %1206 = vmatpush1.bf16.msra.mxu0 %v1203
        %1207 = vmatprep.subr.bf16.mxu0 0
        %1208 = vmatpush1.bf16.msra.mxu0 0
        %1209 = vmatprep.subr.bf16.mxu0 0
        %1210 = vmatpush1.bf16.msra.mxu0 0
        %1211 = vmatprep.subr.bf16.mxu0 0
        %1212 = vmatpush1.bf16.msra.mxu0 0
        %1213 = vmatprep.subr.bf16.mxu0 0
        %1214 = vmatpush1.bf16.msra.mxu0 0
        %1215 = vmatprep.subr.bf16.mxu0 0
        %1216 = vmatpush1.bf16.msra.mxu0 0
        %1217 = vmatprep.subr.bf16.mxu0 0
        %1218 = vmatpush1.bf16.msra.mxu0 0
        %1219 = vmatprep.subr.bf16.mxu0 0
        %1220 = vmatpush1.bf16.msra.mxu0 0
        %1221 = vmatprep.subr.bf16.mxu0 0
        %1222 = vmatpush1.bf16.msra.mxu0 0
        %1223 = vmatprep.subr.bf16.mxu0 0
        %1224 = vmatpush1.bf16.msra.mxu0 0
        %1225 = vmatprep.subr.bf16.mxu0 0
        %1226 = vmatpush1.bf16.msra.mxu0 0
        %1227 = vmatprep.subr.bf16.mxu0 0
        %1228 = vmatpush1.bf16.msra.mxu0 0
        %1229 = vmatprep.subr.bf16.mxu0 0
        %1230 = vmatpush1.bf16.msra.mxu0 0
        %1231 = vmatprep.subr.bf16.mxu0 0
        %1232 = vmatpush1.bf16.msra.mxu0 0
        %1233 = vmatprep.subr.bf16.mxu0 0
        %1234 = vmatpush1.bf16.msra.mxu0 0
        %1235 = vmatprep.subr.bf16.mxu0 0
        %1236 = vmatpush1.bf16.msra.mxu0 0
        %1237 = vmatprep.mubr.bf16.mxu0 0
        %1238 = vmatmul.mubr.bf16.gmra.mrb[0].mxu0 %v1199
        %v1239 = vpop.f32.mrb[0].mxu0
        %v1240 = vadd.f32 0.0, %v1239
        %v1241 = vpop.f32.mrb[0].mxu0
        %v1242 = vpop.f32.mrb[0].mxu0
        %v1243 = vpop.f32.mrb[0].mxu0
        %1244 = vdwg.mxu0
        %1245 = vrot.lane.b32.xlu0 %v933, 64
        %v1246 = vpop.permute.xlu0 %1245
        %v1248 = vsel %vm1147, %v1193, 0
        %v1251 = vsel %vm1201, %v1246, 0
        %1253 = vmatprep.subr.bf16.mxu0 0
        %1254 = vmatpush1.bf16.msra.mxu0 %v1251
        %1255 = vmatprep.subr.bf16.mxu0 0
        %1256 = vmatpush1.bf16.msra.mxu0 0
        %1257 = vmatprep.subr.bf16.mxu0 0
        %1258 = vmatpush1.bf16.msra.mxu0 0
        %1259 = vmatprep.subr.bf16.mxu0 0
        %1260 = vmatpush1.bf16.msra.mxu0 0
        %1261 = vmatprep.subr.bf16.mxu0 0
        %1262 = vmatpush1.bf16.msra.mxu0 0
        %1263 = vmatprep.subr.bf16.mxu0 0
        %1264 = vmatpush1.bf16.msra.mxu0 0
        %1265 = vmatprep.subr.bf16.mxu0 0
        %1266 = vmatpush1.bf16.msra.mxu0 0
        %1267 = vmatprep.subr.bf16.mxu0 0
        %1268 = vmatpush1.bf16.msra.mxu0 0
        %1269 = vmatprep.subr.bf16.mxu0 0
        %1270 = vmatpush1.bf16.msra.mxu0 0
        %1271 = vmatprep.subr.bf16.mxu0 0
        %1272 = vmatpush1.bf16.msra.mxu0 0
        %1273 = vmatprep.subr.bf16.mxu0 0
        %1274 = vmatpush1.bf16.msra.mxu0 0
        %1275 = vmatprep.subr.bf16.mxu0 0
        %1276 = vmatpush1.bf16.msra.mxu0 0
        %1277 = vmatprep.subr.bf16.mxu0 0
        %1278 = vmatpush1.bf16.msra.mxu0 0
        %1279 = vmatprep.subr.bf16.mxu0 0
        %1280 = vmatpush1.bf16.msra.mxu0 0
        %1281 = vmatprep.subr.bf16.mxu0 0
        %1282 = vmatpush1.bf16.msra.mxu0 0
        %1283 = vmatprep.subr.bf16.mxu0 0
        %1284 = vmatpush1.bf16.msra.mxu0 0
        %1285 = vmatprep.mubr.bf16.mxu0 0
        %1286 = vmatmul.mubr.bf16.gmra.mrb[0].mxu0 %v1248
        %v1287 = vpop.f32.mrb[0].mxu0
        %v1288 = vadd.f32 0.0, %v1287
        %v1289 = vpop.f32.mrb[0].mxu0
        %v1290 = vpop.f32.mrb[0].mxu0
        %v1291 = vpop.f32.mrb[0].mxu0
        %1292 = vdwg.mxu0
        %1293 = vrot.lane.b32.xlu0 %v934, 64
        %v1294 = vpop.permute.xlu0 %1293
        %v1296 = vsel %vm1147, %v1194, 0
        %v1299 = vsel %vm1201, %v1294, 0
        %1301 = vmatprep.subr.bf16.mxu0 0
        %1302 = vmatpush1.bf16.msra.mxu0 %v1299
        %1303 = vmatprep.subr.bf16.mxu0 0
        %1304 = vmatpush1.bf16.msra.mxu0 0
        %1305 = vmatprep.subr.bf16.mxu0 0
        %1306 = vmatpush1.bf16.msra.mxu0 0
        %1307 = vmatprep.subr.bf16.mxu0 0
        %1308 = vmatpush1.bf16.msra.mxu0 0
        %1309 = vmatprep.subr.bf16.mxu0 0
        %1310 = vmatpush1.bf16.msra.mxu0 0
        %1311 = vmatprep.subr.bf16.mxu0 0
        %1312 = vmatpush1.bf16.msra.mxu0 0
        %1313 = vmatprep.subr.bf16.mxu0 0
        %1314 = vmatpush1.bf16.msra.mxu0 0
        %1315 = vmatprep.subr.bf16.mxu0 0
        %1316 = vmatpush1.bf16.msra.mxu0 0
        %1317 = vmatprep.subr.bf16.mxu0 0
        %1318 = vmatpush1.bf16.msra.mxu0 0
        %1319 = vmatprep.subr.bf16.mxu0 0
        %1320 = vmatpush1.bf16.msra.mxu0 0
        %1321 = vmatprep.subr.bf16.mxu0 0
        %1322 = vmatpush1.bf16.msra.mxu0 0
        %1323 = vmatprep.subr.bf16.mxu0 0
        %1324 = vmatpush1.bf16.msra.mxu0 0
        %1325 = vmatprep.subr.bf16.mxu0 0
        %1326 = vmatpush1.bf16.msra.mxu0 0
        %1327 = vmatprep.subr.bf16.mxu0 0
        %1328 = vmatpush1.bf16.msra.mxu0 0
        %1329 = vmatprep.subr.bf16.mxu0 0
        %1330 = vmatpush1.bf16.msra.mxu0 0
        %1331 = vmatprep.subr.bf16.mxu0 0
        %1332 = vmatpush1.bf16.msra.mxu0 0
        %1333 = vmatprep.mubr.bf16.mxu0 0
        %1334 = vmatmul.mubr.bf16.gmra.mrb[0].mxu0 %v1296
        %v1335 = vpop.f32.mrb[0].mxu0
        %v1336 = vadd.f32 0.0, %v1335
        %v1337 = vpop.f32.mrb[0].mxu0
        %v1338 = vpop.f32.mrb[0].mxu0
        %v1339 = vpop.f32.mrb[0].mxu0
        %1340 = vdwg.mxu0
        %1341 = vrot.lane.b32.xlu0 %v935, 64
        %v1342 = vpop.permute.xlu0 %1341
        %v1344 = vsel %vm1147, %v1195, 0
        %v1347 = vsel %vm1201, %v1342, 0
        %1349 = vmatprep.subr.bf16.mxu0 0
        %1350 = vmatpush1.bf16.msra.mxu0 %v1347
        %1351 = vmatprep.subr.bf16.mxu0 0
        %1352 = vmatpush1.bf16.msra.mxu0 0
        %1353 = vmatprep.subr.bf16.mxu0 0
        %1354 = vmatpush1.bf16.msra.mxu0 0
        %1355 = vmatprep.subr.bf16.mxu0 0
        %1356 = vmatpush1.bf16.msra.mxu0 0
        %1357 = vmatprep.subr.bf16.mxu0 0
        %1358 = vmatpush1.bf16.msra.mxu0 0
        %1359 = vmatprep.subr.bf16.mxu0 0
        %1360 = vmatpush1.bf16.msra.mxu0 0
        %1361 = vmatprep.subr.bf16.mxu0 0
        %1362 = vmatpush1.bf16.msra.mxu0 0
        %1363 = vmatprep.subr.bf16.mxu0 0
        %1364 = vmatpush1.bf16.msra.mxu0 0
        %1365 = vmatprep.subr.bf16.mxu0 0
        %1366 = vmatpush1.bf16.msra.mxu0 0
        %1367 = vmatprep.subr.bf16.mxu0 0
        %1368 = vmatpush1.bf16.msra.mxu0 0
        %1369 = vmatprep.subr.bf16.mxu0 0
        %1370 = vmatpush1.bf16.msra.mxu0 0
        %1371 = vmatprep.subr.bf16.mxu0 0
        %1372 = vmatpush1.bf16.msra.mxu0 0
        %1373 = vmatprep.subr.bf16.mxu0 0
        %1374 = vmatpush1.bf16.msra.mxu0 0
        %1375 = vmatprep.subr.bf16.mxu0 0
        %1376 = vmatpush1.bf16.msra.mxu0 0
        %1377 = vmatprep.subr.bf16.mxu0 0
        %1378 = vmatpush1.bf16.msra.mxu0 0
        %1379 = vmatprep.subr.bf16.mxu0 0
        %1380 = vmatpush1.bf16.msra.mxu0 0
        %1381 = vmatprep.mubr.bf16.mxu0 0
        %1382 = vmatmul.mubr.bf16.gmra.mrb[0].mxu0 %v1344
        %v1383 = vpop.f32.mrb[0].mxu0
        %v1384 = vadd.f32 0.0, %v1383
        %v1385 = vpop.f32.mrb[0].mxu0
        %v1386 = vpop.f32.mrb[0].mxu0
        %v1387 = vpop.f32.mrb[0].mxu0
        %1388 = vdwg.mxu0
        %1391 = vrot.lane.b32.xlu0 %v1336, 16
        %v1392 = vpop.permute.xlu0 %1391
        %1393 = vrot.lane.b32.xlu0 %v1384, 16
        %v1394 = vpop.permute.xlu0 %1393
        %v1397 = vsel %vm953, %v1240, %v1392
        %v1398 = vsel %vm953, %v1288, %v1394
        %v1399 = vpack.c.bf16 %v1398, %v1397
        %v1400 = vld [vmem:[%s797] sm:$0xf]
        %v1401 = vld [vmem:[%s797 + $0x4] sm:$0xf]
        %v1402 = vld [vmem:[%s797 + $0x8] sm:$0xf]
        %v1403 = vld [vmem:[%s797 + $0xc] sm:$0xf]
        %v1404 = vld [vmem:[%s800] sm:$0x1]
        %v1406 = vlaneseq
        %v1407 = vshrl.u32 %v1406, 7
        %v1408 = vsub.s32 0, %v1407
        %v1409 = vrot.slane %v1404, %v1408
        %v1415 = vunpack.c.l.b16 %v1400
        %v1416 = vunpack.c.l.b16 %v1401
        %v1417 = vunpack.c.l.b16 %v1402
        %v1418 = vunpack.c.l.b16 %v1403
        %v1419 = vpack.c.b16 %v1416, %v1415
        %v1420 = vpack.c.b16 %v1418, %v1417
        %v1424 = vsel %vm865, %v1399, 0
        %1426 = vmatprep.subr.bf16.mxu0 0
        %1427 = vmatpush1.bf16.msra.mxu0 %v1419
        %1428 = vmatprep.subr.bf16.mxu0 0
        %1429 = vmatpush1.bf16.msra.mxu0 %v1420
        %1430 = vmatprep.subr.bf16.mxu0 0
        %1431 = vmatpush1.bf16.msra.mxu0 0
        %1432 = vmatprep.subr.bf16.mxu0 0
        %1433 = vmatpush1.bf16.msra.mxu0 0
        %1434 = vmatprep.subr.bf16.mxu0 0
        %1435 = vmatpush1.bf16.msra.mxu0 0
        %1436 = vmatprep.subr.bf16.mxu0 0
        %1437 = vmatpush1.bf16.msra.mxu0 0
        %1438 = vmatprep.subr.bf16.mxu0 0
        %1439 = vmatpush1.bf16.msra.mxu0 0
        %1440 = vmatprep.subr.bf16.mxu0 0
        %1441 = vmatpush1.bf16.msra.mxu0 0
        %1442 = vmatprep.subr.bf16.mxu0 0
        %1443 = vmatpush1.bf16.msra.mxu0 0
        %1444 = vmatprep.subr.bf16.mxu0 0
        %1445 = vmatpush1.bf16.msra.mxu0 0
        %1446 = vmatprep.subr.bf16.mxu0 0
        %1447 = vmatpush1.bf16.msra.mxu0 0
        %1448 = vmatprep.subr.bf16.mxu0 0
        %1449 = vmatpush1.bf16.msra.mxu0 0
        %1450 = vmatprep.subr.bf16.mxu0 0
        %1451 = vmatpush1.bf16.msra.mxu0 0
        %1452 = vmatprep.subr.bf16.mxu0 0
        %1453 = vmatpush1.bf16.msra.mxu0 0
        %1454 = vmatprep.subr.bf16.mxu0 0
        %1455 = vmatpush1.bf16.msra.mxu0 0
        %1456 = vmatprep.subr.bf16.mxu0 0
        %1457 = vmatpush1.bf16.msra.mxu0 0
        %1458 = vmatprep.mubr.bf16.mxu0 0
        %1459 = vmatmul.mubr.bf16.gmra.mrb[0].mxu0 %v1424
        %v1460 = vpop.f32.mrb[0].mxu0
        %v1461 = vadd.f32 %v1409, %v1460
        %v1462 = vpop.f32.mrb[0].mxu0
        %v1463 = vpop.f32.mrb[0].mxu0
        %v1464 = vadd.f32 %v1409, %v1463
        %v1465 = vpop.f32.mrb[0].mxu0
        %1466 = vdwg.mxu0
        %v1467 = vadd.f32 %v839, %v1461
        %v1468 = vadd.f32 %v840, %v1464
        %v1469 = vsel %vm865, %v1467, 0.0
        %1470 = vadd.xlane.f32.xlu0 %v1469
        %v1471 = vpop.xlane.xlu0 %1470
        %v1472 = vsel %vm865, %v1468, 0.0
        %1473 = vadd.xlane.f32.xlu0 %v1472
        %v1474 = vpop.xlane.xlu0 %1473
        %v1475 = vrcp.pop 32.0
        %v1476 = vmul.f32 %v1471, %v1475
        %v1477 = vmul.f32 %v1474, %v1475
        %v1478 = vsub.f32 %v1467, %v1476
        %v1479 = vsub.f32 %v1468, %v1477
        %v1480 = vmul.f32 %v1478, %v1478
        %v1481 = vmul.f32 %v1479, %v1479
        %v1482 = vsel %vm865, %v1480, 0.0
        %1483 = vadd.xlane.f32.xlu0 %v1482
        %v1484 = vpop.xlane.xlu0 %1483
        %v1485 = vsel %vm865, %v1481, 0.0
        %1486 = vadd.xlane.f32.xlu0 %v1485
        %v1487 = vpop.xlane.xlu0 %1486
        %v1488 = vmul.f32 %v1484, %v1475
        %v1489 = vmul.f32 %v1487, %v1475
        %v1490 = vadd.f32 %v1488, 1e-05
        %v1491 = vadd.f32 %v1489, 1e-05
        %v1492 = vrsqrt.pop %v1490
        %v1493 = vrsqrt.pop %v1491
        %v1494 = vmul.f32 %v1478, %v1492
        %v1495 = vmul.f32 %v1479, %v1493
        %v1496 = vld [vmem:[%s803] sm:$0x1]
        %v1498 = vlaneseq
        %v1499 = vshrl.u32 %v1498, 7
        %v1500 = vsub.s32 0, %v1499
        %v1501 = vrot.slane %v1496, %v1500
        %v1503 = vmul.f32 %v1494, %v1501
        %v1504 = vmul.f32 %v1495, %v1501
        %v1505 = vld [vmem:[%s806] sm:$0x1]
        %v1507 = vlaneseq
        %v1508 = vshrl.u32 %v1507, 7
        %v1509 = vsub.s32 0, %v1508
        %v1510 = vrot.slane %v1505, %v1509
        %v1512 = vadd.f32 %v1503, %v1510
        %v1513 = vadd.f32 %v1504, %v1510
        %v1514 = vpack.c.bf16 %v1513, %v1512
        %v1515 = vld [vmem:[%s811] sm:$0xf]
        %v1516 = vld [vmem:[%s811 + $0x4] sm:$0xf]
        %v1517 = vld [vmem:[%s811 + $0x8] sm:$0xf]
        %v1518 = vld [vmem:[%s811 + $0xc] sm:$0xf]
        %v1519 = vld [vmem:[%s814] sm:$0x1]
        %v1521 = vlaneseq
        %v1522 = vshrl.u32 %v1521, 7
        %v1523 = vsub.s32 0, %v1522
        %v1524 = vrot.slane %v1519, %v1523
        %v1530 = vunpack.c.l.b16 %v1515
        %v1531 = vunpack.c.l.b16 %v1516
        %v1532 = vunpack.c.l.b16 %v1517
        %v1533 = vunpack.c.l.b16 %v1518
        %v1534 = vpack.c.b16 %v1531, %v1530
        %v1535 = vpack.c.b16 %v1533, %v1532
        %v1539 = vsel %vm865, %v1514, 0
        %1541 = vmatprep.subr.bf16.mxu0 0
        %1542 = vmatpush1.bf16.msra.mxu0 %v1534
        %1543 = vmatprep.subr.bf16.mxu0 0
        %1544 = vmatpush1.bf16.msra.mxu0 %v1535
        %1545 = vmatprep.subr.bf16.mxu0 0
        %1546 = vmatpush1.bf16.msra.mxu0 0
        %1547 = vmatprep.subr.bf16.mxu0 0
        %1548 = vmatpush1.bf16.msra.mxu0 0
        %1549 = vmatprep.subr.bf16.mxu0 0
        %1550 = vmatpush1.bf16.msra.mxu0 0
        %1551 = vmatprep.subr.bf16.mxu0 0
        %1552 = vmatpush1.bf16.msra.mxu0 0
        %1553 = vmatprep.subr.bf16.mxu0 0
        %1554 = vmatpush1.bf16.msra.mxu0 0
        %1555 = vmatprep.subr.bf16.mxu0 0
        %1556 = vmatpush1.bf16.msra.mxu0 0
        %1557 = vmatprep.subr.bf16.mxu0 0
        %1558 = vmatpush1.bf16.msra.mxu0 0
        %1559 = vmatprep.subr.bf16.mxu0 0
        %1560 = vmatpush1.bf16.msra.mxu0 0
        %1561 = vmatprep.subr.bf16.mxu0 0
        %1562 = vmatpush1.bf16.msra.mxu0 0
        %1563 = vmatprep.subr.bf16.mxu0 0
        %1564 = vmatpush1.bf16.msra.mxu0 0
        %1565 = vmatprep.subr.bf16.mxu0 0
        %1566 = vmatpush1.bf16.msra.mxu0 0
        %1567 = vmatprep.subr.bf16.mxu0 0
        %1568 = vmatpush1.bf16.msra.mxu0 0
        %1569 = vmatprep.subr.bf16.mxu0 0
        %1570 = vmatpush1.bf16.msra.mxu0 0
        %1571 = vmatprep.subr.bf16.mxu0 0
        %1572 = vmatpush1.bf16.msra.mxu0 0
        %1573 = vmatprep.mubr.bf16.mxu0 0
        %1574 = vmatmul.mubr.bf16.gmra.mrb[0].mxu0 %v1539
        %v1575 = vpop.f32.mrb[0].mxu0
        %v1576 = vadd.f32 %v1524, %v1575
        %v1577 = vpop.f32.mrb[0].mxu0
        %v1578 = vpop.f32.mrb[0].mxu0
        %v1579 = vadd.f32 %v1524, %v1578
        %v1580 = vpop.f32.mrb[0].mxu0
        %1581 = vdwg.mxu0
        %v1582 = vmax.f32 %v1576, 0.0
        %v1583 = vmax.f32 %v1579, 0.0
        %v1584 = vpack.c.bf16 %v1583, %v1582
        %v1585 = vld [vmem:[%s819] sm:$0xf]
        %v1586 = vld [vmem:[%s819 + $0x4] sm:$0xf]
        %v1587 = vld [vmem:[%s819 + $0x8] sm:$0xf]
        %v1588 = vld [vmem:[%s819 + $0xc] sm:$0xf]
        %v1589 = vld [vmem:[%s819 + $0x10] sm:$0xf]
        %v1590 = vld [vmem:[%s819 + $0x14] sm:$0xf]
        %v1591 = vld [vmem:[%s819 + $0x18] sm:$0xf]
        %v1592 = vld [vmem:[%s819 + $0x1c] sm:$0xf]
        %v1593 = vld [vmem:[%s822] sm:$0x1]
        %v1595 = vlaneseq
        %v1596 = vshrl.u32 %v1595, 7
        %v1597 = vsub.s32 0, %v1596
        %v1598 = vrot.slane %v1593, %v1597
        %v1608 = vunpack.c.l.b16 %v1585
        %v1609 = vunpack.c.l.b16 %v1586
        %v1610 = vunpack.c.l.b16 %v1587
        %v1611 = vunpack.c.l.b16 %v1588
        %v1612 = vunpack.c.l.b16 %v1589
        %v1613 = vunpack.c.l.b16 %v1590
        %v1614 = vunpack.c.l.b16 %v1591
        %v1615 = vunpack.c.l.b16 %v1592
        %v1616 = vpack.c.b16 %v1609, %v1608
        %v1617 = vpack.c.b16 %v1611, %v1610
        %v1618 = vpack.c.b16 %v1613, %v1612
        %v1619 = vpack.c.b16 %v1615, %v1614
        %vm1624 = vcmask 523264
        %v1626 = vsel %vm1624, %v1584, 0
        %1628 = vmatprep.subr.bf16.mxu0 0
        %1629 = vmatpush1.bf16.msra.mxu0 %v1616
        %1630 = vmatprep.subr.bf16.mxu0 0
        %1631 = vmatpush1.bf16.msra.mxu0 %v1617
        %1632 = vmatprep.subr.bf16.mxu0 0
        %1633 = vmatpush1.bf16.msra.mxu0 %v1618
        %1634 = vmatprep.subr.bf16.mxu0 0
        %1635 = vmatpush1.bf16.msra.mxu0 %v1619
        %1636 = vmatprep.subr.bf16.mxu0 0
        %1637 = vmatpush1.bf16.msra.mxu0 0
        %1638 = vmatprep.subr.bf16.mxu0 0
        %1639 = vmatpush1.bf16.msra.mxu0 0
        %1640 = vmatprep.subr.bf16.mxu0 0
        %1641 = vmatpush1.bf16.msra.mxu0 0
        %1642 = vmatprep.subr.bf16.mxu0 0
        %1643 = vmatpush1.bf16.msra.mxu0 0
        %1644 = vmatprep.subr.bf16.mxu0 0
        %1645 = vmatpush1.bf16.msra.mxu0 0
        %1646 = vmatprep.subr.bf16.mxu0 0
        %1647 = vmatpush1.bf16.msra.mxu0 0
        %1648 = vmatprep.subr.bf16.mxu0 0
        %1649 = vmatpush1.bf16.msra.mxu0 0
        %1650 = vmatprep.subr.bf16.mxu0 0
        %1651 = vmatpush1.bf16.msra.mxu0 0
        %1652 = vmatprep.subr.bf16.mxu0 0
        %1653 = vmatpush1.bf16.msra.mxu0 0
        %1654 = vmatprep.subr.bf16.mxu0 0
        %1655 = vmatpush1.bf16.msra.mxu0 0
        %1656 = vmatprep.subr.bf16.mxu0 0
        %1657 = vmatpush1.bf16.msra.mxu0 0
        %1658 = vmatprep.subr.bf16.mxu0 0
        %1659 = vmatpush1.bf16.msra.mxu0 0
        %1660 = vmatprep.mubr.bf16.mxu0 0
        %1661 = vmatmul.mubr.bf16.gmra.mrb[0].mxu0 %v1626
        %v1662 = vpop.f32.mrb[0].mxu0
        %v1663 = vadd.f32 %v1598, %v1662
        %v1664 = vpop.f32.mrb[0].mxu0
        %v1665 = vpop.f32.mrb[0].mxu0
        %v1666 = vadd.f32 %v1598, %v1665
        %v1667 = vpop.f32.mrb[0].mxu0
        %1668 = vdwg.mxu0
        %v1669 = vadd.f32 %v1512, %v1663
        %v1670 = vadd.f32 %v1513, %v1666
        %v1671 = vsel %vm865, %v1669, 0.0
        %1672 = vadd.xlane.f32.xlu0 %v1671
        %v1673 = vpop.xlane.xlu0 %1672
        %v1674 = vsel %vm865, %v1670, 0.0
        %1675 = vadd.xlane.f32.xlu0 %v1674
        %v1676 = vpop.xlane.xlu0 %1675
        %v1677 = vmul.f32 %v1673, %v1475
        %v1678 = vmul.f32 %v1676, %v1475
        %v1679 = vsub.f32 %v1669, %v1677
        %v1680 = vsub.f32 %v1670, %v1678
        %v1681 = vmul.f32 %v1679, %v1679
        %v1682 = vmul.f32 %v1680, %v1680
        %v1683 = vsel %vm865, %v1681, 0.0
        %1684 = vadd.xlane.f32.xlu0 %v1683
        %v1685 = vpop.xlane.xlu0 %1684
        %v1686 = vsel %vm865, %v1682, 0.0
        %1687 = vadd.xlane.f32.xlu0 %v1686
        %v1688 = vpop.xlane.xlu0 %1687
        %v1689 = vmul.f32 %v1685, %v1475
        %v1690 = vmul.f32 %v1688, %v1475
        %v1691 = vadd.f32 %v1689, 1e-05
        %v1692 = vadd.f32 %v1690, 1e-05
        %v1693 = vrsqrt.pop %v1691
        %v1694 = vrsqrt.pop %v1692
        %v1695 = vmul.f32 %v1679, %v1693
        %v1696 = vmul.f32 %v1680, %v1694
        %v1697 = vld [vmem:[%s825] sm:$0x1]
        %v1699 = vlaneseq
        %v1700 = vshrl.u32 %v1699, 7
        %v1701 = vsub.s32 0, %v1700
        %v1702 = vrot.slane %v1697, %v1701
        %v1704 = vmul.f32 %v1695, %v1702
        %v1705 = vmul.f32 %v1696, %v1702
        %v1706 = vld [vmem:[%s828] sm:$0x1]
        %v1708 = vlaneseq
        %v1709 = vshrl.u32 %v1708, 7
        %v1710 = vsub.s32 0, %v1709
        %v1711 = vrot.slane %v1706, %v1710
        %v1713 = vadd.f32 %v1704, %v1711
        %v1714 = vadd.f32 %v1705, %v1711
        %1715 = vst.msk [vmem:[#allocation2] sm:$0xff] %vm865, %v1713
        %1716 = vst.msk [vmem:[#allocation2 + $0x8] sm:$0xff] %vm865, %v1714
        %p1717 = scmp.eq.s32.totalorder %s34, 1
        // Predicated region
        $region93: #{attr_network_forward.1} parent=87 // pred_check
          %p1718 = pneg %p1717
        $region94: #{attr_network_forward.1} parent=87 // pred_check_branch
          %1720 = sbr.rel (%p1718) target = $region96
        $region95: #{attr_network_forward.1} parent=87 // pred_region
          %v1721 = vld [vmem:[%s772] sm:$0xff]
          %v1722 = vld [vmem:[%s772 + $0x8] sm:$0xff]
          %1724 = vset.pattern.permute.xlu0 0
          %1725 = vperm.xlu0 %1724, %v1721
          %v1726 = vpop.permute.xlu0 %1725
          %1729 = vset.pattern.permute.xlu0 0
          %1730 = vperm.xlu0 %1729, %v1722
          %v1731 = vpop.permute.xlu0 %1730
          %v1733 = vmul.f32 %v1726, %v1713
          %v1734 = vmul.f32 %v1731, %v1714
          %v1735 = vsel %vm865, %v1733, 0.0
          %v1736 = vrot.slane %v1735, 4
          %v1737 = vadd.f32 %v1735, %v1736
          %v1738 = vrot.slane %v1737, 2
          %v1739 = vadd.f32 %v1737, %v1738
          %v1740 = vrot.slane %v1739, 1
          %v1741 = vadd.f32 %v1739, %v1740
          %v1742 = vsel %vm865, %v1734, 0.0
          %v1743 = vrot.slane %v1742, 4
          %v1744 = vadd.f32 %v1742, %v1743
          %v1745 = vrot.slane %v1744, 2
          %v1746 = vadd.f32 %v1744, %v1745
          %v1747 = vrot.slane %v1746, 1
          %v1748 = vadd.f32 %v1746, %v1747
          %1749 = vset.pattern.permute.xlu0 1
          %1750 = vperm.xlu0 %1749, %v1721
          %v1751 = vpop.permute.xlu0 %1750
          %1753 = vset.pattern.permute.xlu0 1
          %1754 = vperm.xlu0 %1753, %v1722
          %v1755 = vpop.permute.xlu0 %1754
          %v1757 = vmul.f32 %v1751, %v1713
          %v1758 = vmul.f32 %v1755, %v1714
          %v1759 = vsel %vm865, %v1757, 0.0
          %v1760 = vrot.slane %v1759, 4
          %v1761 = vadd.f32 %v1759, %v1760
          %v1762 = vrot.slane %v1761, 2
          %v1763 = vadd.f32 %v1761, %v1762
          %v1764 = vrot.slane %v1763, 1
          %v1765 = vadd.f32 %v1763, %v1764
          %v1766 = vsel %vm865, %v1758, 0.0
          %v1767 = vrot.slane %v1766, 4
          %v1768 = vadd.f32 %v1766, %v1767
          %v1769 = vrot.slane %v1768, 2
          %v1770 = vadd.f32 %v1768, %v1769
          %v1771 = vrot.slane %v1770, 1
          %v1772 = vadd.f32 %v1770, %v1771
          %v1773 = vld [vmem:[%s777] sm:$0x3]
          %vm1776 = vcmask 1041409
          %v1777 = vsel %vm1776, %v1748, %v1741
          %1780 = vrot.lane.b32.xlu0 %v1773, 32
          %v1781 = vpop.permute.xlu0 %1780
          %v1785 = vsel %vm1776, %v1772, %v1765
          %1786 = vrot.lane.b32.xlu0 %v1785, 48
          %v1787 = vpop.permute.xlu0 %1786
          %1789 = vrot.lane.b32.xlu0 %v1773, 64
          %v1790 = vpop.permute.xlu0 %1789
          %v1792 = vsel %vm865, %v1777, %v1781
          %vm1793 = vcmask 392192
          %v1794 = vsel %vm1793, %v1792, %v1787
          %vm1795 = vcmask 654336
          %v1796 = vsel %vm1795, %v1794, %v1790
          %v1799 = vunpack.c.l.s4 1966171168
          %v1800 = vunpack.c.0.s8 %v1799
          %v1801 = vlaneseq
          %v1802 = vshrl.u32 %v1801, 7
          %v1803 = vsub.s32 %v1800, %v1802
          %v1804 = vrot.slane %v1796, %v1803
          %v1805 = vcombine.high %v1804, %v1804
          %v1807 = vunpack.c.l.s4 1966171168
          %v1808 = vunpack.c.0.s8 %v1807
          %v1809 = vlaneseq
          %v1810 = vshrl.u32 %v1809, 7
          %v1811 = vsub.s32 %v1808, %v1810
          %v1812 = vrot.slane %v1804, %v1811
          %v1814 = vunpack.c.l.s4 1966171168
          %v1815 = vunpack.c.0.s8 %v1814
          %v1816 = vlaneseq
          %v1817 = vshrl.u32 %v1816, 7
          %v1818 = vsub.s32 %v1815, %v1817
          %v1819 = vrot.slane %v1805, %v1818
          %v1820 = vld [vmem:[%s783] sm:$0xf]
          %v1821 = vld [vmem:[%s783 + $0x4] sm:$0xf]
          %v1822 = vld [vmem:[%s783 + $0x8] sm:$0xf]
          %v1823 = vld [vmem:[%s783 + $0xc] sm:$0xf]
          %v1824 = vld [vmem:[%s783 + $0x10] sm:$0xf]
          %v1825 = vld [vmem:[%s783 + $0x14] sm:$0xf]
          %v1826 = vld [vmem:[%s783 + $0x18] sm:$0xf]
          %v1827 = vld [vmem:[%s783 + $0x1c] sm:$0xf]
          %v1828 = vld [vmem:[%s783 + $0x20] sm:$0xf]
          %v1829 = vld [vmem:[%s783 + $0x24] sm:$0xf]
          %v1830 = vld [vmem:[%s783 + $0x28] sm:$0xf]
          %v1831 = vld [vmem:[%s783 + $0x2c] sm:$0xf]
          %v1832 = vld [vmem:[%s783 + $0x30] sm:$0xf]
          %v1833 = vld [vmem:[%s783 + $0x34] sm:$0xf]
          %v1834 = vld [vmem:[%s783 + $0x38] sm:$0xf]
          %v1835 = vld [vmem:[%s783 + $0x3c] sm:$0xf]
          %v1836 = vld [vmem:[%s783 + $0x40] sm:$0xf]
          %v1837 = vld [vmem:[%s783 + $0x44] sm:$0xf]
          %v1838 = vld [vmem:[%s783 + $0x48] sm:$0xf]
          %v1839 = vld [vmem:[%s783 + $0x4c] sm:$0xf]
          %v1840 = vld [vmem:[%s783 + $0x50] sm:$0xf]
          %v1841 = vld [vmem:[%s783 + $0x54] sm:$0xf]
          %v1842 = vld [vmem:[%s783 + $0x58] sm:$0xf]
          %v1843 = vld [vmem:[%s783 + $0x5c] sm:$0xf]
          %v1844 = vld [vmem:[%s783 + $0x60] sm:$0xf]
          %v1845 = vld [vmem:[%s783 + $0x64] sm:$0xf]
          %v1846 = vld [vmem:[%s783 + $0x68] sm:$0xf]
          %v1847 = vld [vmem:[%s783 + $0x6c] sm:$0xf]
          %v1848 = vld [vmem:[%s783 + $0x70] sm:$0xf]
          %v1849 = vld [vmem:[%s783 + $0x74] sm:$0xf]
          %v1850 = vld [vmem:[%s783 + $0x78] sm:$0xf]
          %v1851 = vld [vmem:[%s783 + $0x7c] sm:$0xf]
          %v1852 = vunpack.c.l.bf16 %v1820
          %v1853 = vunpack.c.l.bf16 %v1821
          %v1854 = vunpack.c.l.bf16 %v1822
          %v1855 = vunpack.c.l.bf16 %v1823
          %v1856 = vunpack.c.l.bf16 %v1824
          %v1857 = vunpack.c.l.bf16 %v1825
          %v1858 = vunpack.c.l.bf16 %v1826
          %v1859 = vunpack.c.l.bf16 %v1827
          %v1860 = vunpack.c.l.bf16 %v1828
          %v1861 = vunpack.c.l.bf16 %v1829
          %v1862 = vunpack.c.l.bf16 %v1830
          %v1863 = vunpack.c.l.bf16 %v1831
          %v1864 = vunpack.c.l.bf16 %v1832
          %v1865 = vunpack.c.l.bf16 %v1833
          %v1866 = vunpack.c.l.bf16 %v1834
          %v1867 = vunpack.c.l.bf16 %v1835
          %v1868 = vunpack.c.l.bf16 %v1836
          %v1869 = vunpack.c.l.bf16 %v1837
          %v1870 = vunpack.c.l.bf16 %v1838
          %v1871 = vunpack.c.l.bf16 %v1839
          %v1872 = vunpack.c.l.bf16 %v1840
          %v1873 = vunpack.c.l.bf16 %v1841
          %v1874 = vunpack.c.l.bf16 %v1842
          %v1875 = vunpack.c.l.bf16 %v1843
          %v1876 = vunpack.c.l.bf16 %v1844
          %v1877 = vunpack.c.l.bf16 %v1845
          %v1878 = vunpack.c.l.bf16 %v1846
          %v1879 = vunpack.c.l.bf16 %v1847
          %v1880 = vunpack.c.l.bf16 %v1848
          %v1881 = vunpack.c.l.bf16 %v1849
          %v1882 = vunpack.c.l.bf16 %v1850
          %v1883 = vunpack.c.l.bf16 %v1851
          %v1884 = vlaneseq
          %v1885 = vshrl.u32 %v1884, 7
          %v1886 = vsub.s32 0, %v1885
          %v1887 = vrot.slane %v1812, %v1886
          %v1888 = vlaneseq
          %v1889 = vshrl.u32 %v1888, 7
          %v1890 = vsub.s32 0, %v1889
          %v1891 = vrot.slane %v1819, %v1890
          %v1894 = vmul.f32 %v1887, %v1852
          %v1895 = vmul.f32 %v1887, %v1853
          %v1896 = vmul.f32 %v1887, %v1854
          %v1897 = vmul.f32 %v1887, %v1855
          %v1898 = vmul.f32 %v1887, %v1856
          %v1899 = vmul.f32 %v1887, %v1857
          %v1900 = vmul.f32 %v1887, %v1858
          %v1901 = vmul.f32 %v1887, %v1859
          %v1902 = vmul.f32 %v1887, %v1860
          %v1903 = vmul.f32 %v1887, %v1861
          %v1904 = vmul.f32 %v1887, %v1862
          %v1905 = vmul.f32 %v1887, %v1863
          %v1906 = vmul.f32 %v1887, %v1864
          %v1907 = vmul.f32 %v1887, %v1865
          %v1908 = vmul.f32 %v1887, %v1866
          %v1909 = vmul.f32 %v1887, %v1867
          %v1910 = vmul.f32 %v1891, %v1868
          %v1911 = vmul.f32 %v1891, %v1869
          %v1912 = vmul.f32 %v1891, %v1870
          %v1913 = vmul.f32 %v1891, %v1871
          %v1914 = vmul.f32 %v1891, %v1872
          %v1915 = vmul.f32 %v1891, %v1873
          %v1916 = vmul.f32 %v1891, %v1874
          %v1917 = vmul.f32 %v1891, %v1875
          %v1918 = vmul.f32 %v1891, %v1876
          %v1919 = vmul.f32 %v1891, %v1877
          %v1920 = vmul.f32 %v1891, %v1878
          %v1921 = vmul.f32 %v1891, %v1879
          %v1922 = vmul.f32 %v1891, %v1880
          %v1923 = vmul.f32 %v1891, %v1881
          %v1924 = vmul.f32 %v1891, %v1882
          %v1925 = vmul.f32 %v1891, %v1883
          %vm1926 = vcmask 785408
          %v1927 = vsel %vm1926, %v1894, 0.0
          %1928 = vadd.xlane.f32.xlu0 %v1927
          %v1929 = vpop.xlane.xlu0 %1928
          %v1930 = vsel %vm1926, %v1895, 0.0
          %1931 = vadd.xlane.f32.xlu0 %v1930
          %v1932 = vpop.xlane.xlu0 %1931
          %v1933 = vsel %vm1926, %v1896, 0.0
          %1934 = vadd.xlane.f32.xlu0 %v1933
          %v1935 = vpop.xlane.xlu0 %1934
          %v1936 = vsel %vm1926, %v1897, 0.0
          %1937 = vadd.xlane.f32.xlu0 %v1936
          %v1938 = vpop.xlane.xlu0 %1937
          %v1939 = vsel %vm1926, %v1898, 0.0
          %1940 = vadd.xlane.f32.xlu0 %v1939
          %v1941 = vpop.xlane.xlu0 %1940
          %v1942 = vsel %vm1926, %v1899, 0.0
          %1943 = vadd.xlane.f32.xlu0 %v1942
          %v1944 = vpop.xlane.xlu0 %1943
          %v1945 = vsel %vm1926, %v1900, 0.0
          %1946 = vadd.xlane.f32.xlu0 %v1945
          %v1947 = vpop.xlane.xlu0 %1946
          %v1948 = vsel %vm1926, %v1901, 0.0
          %1949 = vadd.xlane.f32.xlu0 %v1948
          %v1950 = vpop.xlane.xlu0 %1949
          %v1951 = vsel %vm1926, %v1902, 0.0
          %1952 = vadd.xlane.f32.xlu0 %v1951
          %v1953 = vpop.xlane.xlu0 %1952
          %v1954 = vsel %vm1926, %v1903, 0.0
          %1955 = vadd.xlane.f32.xlu0 %v1954
          %v1956 = vpop.xlane.xlu0 %1955
          %v1957 = vsel %vm1926, %v1904, 0.0
          %1958 = vadd.xlane.f32.xlu0 %v1957
          %v1959 = vpop.xlane.xlu0 %1958
          %v1960 = vsel %vm1926, %v1905, 0.0
          %1961 = vadd.xlane.f32.xlu0 %v1960
          %v1962 = vpop.xlane.xlu0 %1961
          %v1963 = vsel %vm1926, %v1906, 0.0
          %1964 = vadd.xlane.f32.xlu0 %v1963
          %v1965 = vpop.xlane.xlu0 %1964
          %v1966 = vsel %vm1926, %v1907, 0.0
          %1967 = vadd.xlane.f32.xlu0 %v1966
          %v1968 = vpop.xlane.xlu0 %1967
          %v1969 = vsel %vm1926, %v1908, 0.0
          %1970 = vadd.xlane.f32.xlu0 %v1969
          %v1971 = vpop.xlane.xlu0 %1970
          %v1972 = vsel %vm1926, %v1909, 0.0
          %1973 = vadd.xlane.f32.xlu0 %v1972
          %v1974 = vpop.xlane.xlu0 %1973
          %v1975 = vsel %vm1926, %v1910, 0.0
          %1976 = vadd.xlane.f32.xlu0 %v1975
          %v1977 = vpop.xlane.xlu0 %1976
          %v1978 = vsel %vm1926, %v1911, 0.0
          %1979 = vadd.xlane.f32.xlu0 %v1978
          %v1980 = vpop.xlane.xlu0 %1979
          %v1981 = vsel %vm1926, %v1912, 0.0
          %1982 = vadd.xlane.f32.xlu0 %v1981
          %v1983 = vpop.xlane.xlu0 %1982
          %v1984 = vsel %vm1926, %v1913, 0.0
          %1985 = vadd.xlane.f32.xlu0 %v1984
          %v1986 = vpop.xlane.xlu0 %1985
          %v1987 = vsel %vm1926, %v1914, 0.0
          %1988 = vadd.xlane.f32.xlu0 %v1987
          %v1989 = vpop.xlane.xlu0 %1988
          %v1990 = vsel %vm1926, %v1915, 0.0
          %1991 = vadd.xlane.f32.xlu0 %v1990
          %v1992 = vpop.xlane.xlu0 %1991
          %v1993 = vsel %vm1926, %v1916, 0.0
          %1994 = vadd.xlane.f32.xlu0 %v1993
          %v1995 = vpop.xlane.xlu0 %1994
          %v1996 = vsel %vm1926, %v1917, 0.0
          %1997 = vadd.xlane.f32.xlu0 %v1996
          %v1998 = vpop.xlane.xlu0 %1997
          %v1999 = vsel %vm1926, %v1918, 0.0
          %2000 = vadd.xlane.f32.xlu0 %v1999
          %v2001 = vpop.xlane.xlu0 %2000
          %v2002 = vsel %vm1926, %v1919, 0.0
          %2003 = vadd.xlane.f32.xlu0 %v2002
          %v2004 = vpop.xlane.xlu0 %2003
          %v2005 = vsel %vm1926, %v1920, 0.0
          %2006 = vadd.xlane.f32.xlu0 %v2005
          %v2007 = vpop.xlane.xlu0 %2006
          %v2008 = vsel %vm1926, %v1921, 0.0
          %2009 = vadd.xlane.f32.xlu0 %v2008
          %v2010 = vpop.xlane.xlu0 %2009
          %v2011 = vsel %vm1926, %v1922, 0.0
          %2012 = vadd.xlane.f32.xlu0 %v2011
          %v2013 = vpop.xlane.xlu0 %2012
          %v2014 = vsel %vm1926, %v1923, 0.0
          %2015 = vadd.xlane.f32.xlu0 %v2014
          %v2016 = vpop.xlane.xlu0 %2015
          %v2017 = vsel %vm1926, %v1924, 0.0
          %2018 = vadd.xlane.f32.xlu0 %v2017
          %v2019 = vpop.xlane.xlu0 %2018
          %v2020 = vsel %vm1926, %v1925, 0.0
          %2021 = vadd.xlane.f32.xlu0 %v2020
          %v2022 = vpop.xlane.xlu0 %2021
          %v2055 = vlaneseq
          %v2056 = vand.u32 %v2055, 127
          %v2057 = vlaneseq
          %v2058 = vshrl.u32 %v2057, 7
          %v2059 = vsub.s32 %v2056, %v2058
          %v2060 = vrot.slane %v1929, %v2059
          %v2061 = vadd.s32 %v2056, 4294967288
          %v2062 = vlaneseq
          %v2063 = vshrl.u32 %v2062, 7
          %v2064 = vsub.s32 %v2061, %v2063
          %v2065 = vrot.slane %v1932, %v2064
          %vm2066 = vcmask 130112
          %v2067 = vsel %vm2066, %v2065, %v2060
          %v2068 = vadd.s32 %v2056, 4294967280
          %v2069 = vlaneseq
          %v2070 = vshrl.u32 %v2069, 7
          %v2071 = vsub.s32 %v2068, %v2070
          %v2072 = vrot.slane %v1935, %v2071
          %vm2073 = vcmask 195712
          %v2074 = vsel %vm2073, %v2072, %v2067
          %v2075 = vadd.s32 %v2056, 4294967272
          %v2076 = vlaneseq
          %v2077 = vshrl.u32 %v2076, 7
          %v2078 = vsub.s32 %v2075, %v2077
          %v2079 = vrot.slane %v1938, %v2078
          %vm2080 = vcmask 261312
          %v2081 = vsel %vm2080, %v2079, %v2074
          %v2082 = vadd.s32 %v2056, 4294967264
          %v2083 = vlaneseq
          %v2084 = vshrl.u32 %v2083, 7
          %v2085 = vsub.s32 %v2082, %v2084
          %v2086 = vrot.slane %v1941, %v2085
          %vm2087 = vcmask 326912
          %v2088 = vsel %vm2087, %v2086, %v2081
          %v2089 = vadd.s32 %v2056, 4294967256
          %v2090 = vlaneseq
          %v2091 = vshrl.u32 %v2090, 7
          %v2092 = vsub.s32 %v2089, %v2091
          %v2093 = vrot.slane %v1944, %v2092
          %vm2094 = vcmask 392512
          %v2095 = vsel %vm2094, %v2093, %v2088
          %v2096 = vadd.s32 %v2056, 4294967248
          %v2097 = vlaneseq
          %v2098 = vshrl.u32 %v2097, 7
          %v2099 = vsub.s32 %v2096, %v2098
          %v2100 = vrot.slane %v1947, %v2099
          %vm2101 = vcmask 458112
          %v2102 = vsel %vm2101, %v2100, %v2095
          %v2103 = vadd.s32 %v2056, 4294967240
          %v2104 = vlaneseq
          %v2105 = vshrl.u32 %v2104, 7
          %v2106 = vsub.s32 %v2103, %v2105
          %v2107 = vrot.slane %v1950, %v2106
          %vm2108 = vcmask 523712
          %v2109 = vsel %vm2108, %v2107, %v2102
          %v2110 = vadd.s32 %v2056, 4294967232
          %v2111 = vlaneseq
          %v2112 = vshrl.u32 %v2111, 7
          %v2113 = vsub.s32 %v2110, %v2112
          %v2114 = vrot.slane %v1953, %v2113
          %vm2115 = vcmask 589312
          %v2116 = vsel %vm2115, %v2114, %v2109
          %v2117 = vadd.s32 %v2056, 4294967224
          %v2118 = vlaneseq
          %v2119 = vshrl.u32 %v2118, 7
          %v2120 = vsub.s32 %v2117, %v2119
          %v2121 = vrot.slane %v1956, %v2120
          %vm2122 = vcmask 654912
          %v2123 = vsel %vm2122, %v2121, %v2116
          %v2124 = vadd.s32 %v2056, 4294967216
          %v2125 = vlaneseq
          %v2126 = vshrl.u32 %v2125, 7
          %v2127 = vsub.s32 %v2124, %v2126
          %v2128 = vrot.slane %v1959, %v2127
          %vm2129 = vcmask 720512
          %v2130 = vsel %vm2129, %v2128, %v2123
          %v2131 = vadd.s32 %v2056, 4294967208
          %v2132 = vlaneseq
          %v2133 = vshrl.u32 %v2132, 7
          %v2134 = vsub.s32 %v2131, %v2133
          %v2135 = vrot.slane %v1962, %v2134
          %vm2136 = vcmask 786112
          %v2137 = vsel %vm2136, %v2135, %v2130
          %v2138 = vadd.s32 %v2056, 4294967200
          %v2139 = vlaneseq
          %v2140 = vshrl.u32 %v2139, 7
          %v2141 = vsub.s32 %v2138, %v2140
          %v2142 = vrot.slane %v1965, %v2141
          %vm2143 = vcmask 851712
          %v2144 = vsel %vm2143, %v2142, %v2137
          %v2145 = vadd.s32 %v2056, 4294967192
          %v2146 = vlaneseq
          %v2147 = vshrl.u32 %v2146, 7
          %v2148 = vsub.s32 %v2145, %v2147
          %v2149 = vrot.slane %v1968, %v2148
          %vm2150 = vcmask 917312
          %v2151 = vsel %vm2150, %v2149, %v2144
          %v2152 = vadd.s32 %v2056, 4294967184
          %v2153 = vlaneseq
          %v2154 = vshrl.u32 %v2153, 7
          %v2155 = vsub.s32 %v2152, %v2154
          %v2156 = vrot.slane %v1971, %v2155
          %vm2157 = vcmask 982912
          %v2158 = vsel %vm2157, %v2156, %v2151
          %v2159 = vadd.s32 %v2056, 4294967176
          %v2160 = vlaneseq
          %v2161 = vshrl.u32 %v2160, 7
          %v2162 = vsub.s32 %v2159, %v2161
          %v2163 = vrot.slane %v1974, %v2162
          %vm2164 = vcmask 1048512
          %v2165 = vsel %vm2164, %v2163, %v2158
          %v2166 = vlaneseq
          %v2167 = vshrl.u32 %v2166, 7
          %v2168 = vsub.s32 %v2056, %v2167
          %v2169 = vrot.slane %v1977, %v2168
          %v2170 = vlaneseq
          %v2171 = vshrl.u32 %v2170, 7
          %v2172 = vsub.s32 %v2061, %v2171
          %v2173 = vrot.slane %v1980, %v2172
          %v2174 = vsel %vm2066, %v2173, %v2169
          %v2175 = vlaneseq
          %v2176 = vshrl.u32 %v2175, 7
          %v2177 = vsub.s32 %v2068, %v2176
          %v2178 = vrot.slane %v1983, %v2177
          %v2179 = vsel %vm2073, %v2178, %v2174
          %v2180 = vlaneseq
          %v2181 = vshrl.u32 %v2180, 7
          %v2182 = vsub.s32 %v2075, %v2181
          %v2183 = vrot.slane %v1986, %v2182
          %v2184 = vsel %vm2080, %v2183, %v2179
          %v2185 = vlaneseq
          %v2186 = vshrl.u32 %v2185, 7
          %v2187 = vsub.s32 %v2082, %v2186
          %v2188 = vrot.slane %v1989, %v2187
          %v2189 = vsel %vm2087, %v2188, %v2184
          %v2190 = vlaneseq
          %v2191 = vshrl.u32 %v2190, 7
          %v2192 = vsub.s32 %v2089, %v2191
          %v2193 = vrot.slane %v1992, %v2192
          %v2194 = vsel %vm2094, %v2193, %v2189
          %v2195 = vlaneseq
          %v2196 = vshrl.u32 %v2195, 7
          %v2197 = vsub.s32 %v2096, %v2196
          %v2198 = vrot.slane %v1995, %v2197
          %v2199 = vsel %vm2101, %v2198, %v2194
          %v2200 = vlaneseq
          %v2201 = vshrl.u32 %v2200, 7
          %v2202 = vsub.s32 %v2103, %v2201
          %v2203 = vrot.slane %v1998, %v2202
          %v2204 = vsel %vm2108, %v2203, %v2199
          %v2205 = vlaneseq
          %v2206 = vshrl.u32 %v2205, 7
          %v2207 = vsub.s32 %v2110, %v2206
          %v2208 = vrot.slane %v2001, %v2207
          %v2209 = vsel %vm2115, %v2208, %v2204
          %v2210 = vlaneseq
          %v2211 = vshrl.u32 %v2210, 7
          %v2212 = vsub.s32 %v2117, %v2211
          %v2213 = vrot.slane %v2004, %v2212
          %v2214 = vsel %vm2122, %v2213, %v2209
          %v2215 = vlaneseq
          %v2216 = vshrl.u32 %v2215, 7
          %v2217 = vsub.s32 %v2124, %v2216
          %v2218 = vrot.slane %v2007, %v2217
          %v2219 = vsel %vm2129, %v2218, %v2214
          %v2220 = vlaneseq
          %v2221 = vshrl.u32 %v2220, 7
          %v2222 = vsub.s32 %v2131, %v2221
          %v2223 = vrot.slane %v2010, %v2222
          %v2224 = vsel %vm2136, %v2223, %v2219
          %v2225 = vlaneseq
          %v2226 = vshrl.u32 %v2225, 7
          %v2227 = vsub.s32 %v2138, %v2226
          %v2228 = vrot.slane %v2013, %v2227
          %v2229 = vsel %vm2143, %v2228, %v2224
          %v2230 = vlaneseq
          %v2231 = vshrl.u32 %v2230, 7
          %v2232 = vsub.s32 %v2145, %v2231
          %v2233 = vrot.slane %v2016, %v2232
          %v2234 = vsel %vm2150, %v2233, %v2229
          %v2235 = vlaneseq
          %v2236 = vshrl.u32 %v2235, 7
          %v2237 = vsub.s32 %v2152, %v2236
          %v2238 = vrot.slane %v2019, %v2237
          %v2239 = vsel %vm2157, %v2238, %v2234
          %v2240 = vlaneseq
          %v2241 = vshrl.u32 %v2240, 7
          %v2242 = vsub.s32 %v2159, %v2241
          %v2243 = vrot.slane %v2022, %v2242
          %v2244 = vsel %vm2164, %v2243, %v2239
          %v2245 = vsel %vm1776, %v2244, %v2165
          %2247 = vst [vmem:[#allocation3] sm:$0x3] %v2245
        $region96: #{attr_network_forward.1} parent=87 // pred_fallthru
          _
        // Predicated region
        $region97: #{attr_network_forward.1} parent=87 // pred_check
          %p2248 = pneg %p501
        $region98: #{attr_network_forward.1} parent=87 // pred_check_branch
          %2250 = sbr.rel (%p2248) target = $region100
        $region99: #{attr_network_forward.1} parent=87 // pred_region
          %s2252 = ssub.s32 32, 32
          %2253 = vsyncadd [#allocation4], %s2252
          %s2254 = smul.addr %s33, 32
          %s2255 = scalar_lea.hbm %s17, %s2254
          %s2257 = sshll.u32 [#allocation3], 4
          %s2258 = int_to_ptr.vmem [resolvable:$true] %s2257
          %2260 = dma.vmem_to_hbm [thread:$0]  %s2258, 32, %s2255, [#allocation4]
        $region100: #{attr_network_forward.1} parent=87 // pred_fallthru
          _
        // Predicated region
        $region101: #{attr_network_forward.1} parent=87 // pred_check
          %p2261 = pneg %p501
        $region102: #{attr_network_forward.1} parent=87 // pred_check_branch
          %2263 = sbr.rel (%p2261) target = $region104
        $region103: #{attr_network_forward.1} parent=87 // pred_region
          %2264 = dma.done [#allocation4], 32
        $region104: #{attr_network_forward.1} parent=87 // pred_fallthru
          _
      $region88: #{attr_network_forward.1} parent=5 // pred_fallthru
        _
      %p2265 = scmp.le.s32.totalorder 2, %s24
      // Predicated region
      $region105: #{attr_network_forward.1} parent=5 // pred_check
        %p2266 = pneg %p2265
      $region106: #{attr_network_forward.1} parent=5 // pred_check_branch
        %2268 = sbr.rel (%p2266) target = $region108
      $region107: #{attr_network_forward.1} parent=5 // pred_region
        %s2269 = ssub.s32 %s24, 2
      $region108: #{attr_network_forward.1} parent=5 // pred_fallthru
        _
    $region6: #{attr_network_forward.1} parent=1 // loop_footer
      %s28 = sadd.s32 1, %s24
    $region7: #{attr_network_forward.1} parent=1 // loop_footer_branch
      %23 = sbr.rel target = $region3
    $region8: #{attr_network_forward.1} parent=1 // loop_exit
      _
    %2270 = vsyncpa [#allocation4], 1
    %s2271 = scalar_lea.sflag [#allocation4], 1
    %2272 = vsyncpa %s2271, 1

</llo_original>
